<compile_context>
chip_gen: v5e
topology: v5e:2x2
jax: 0.10.0
libtpu: 0.0.40
codegen_flags: <defaults>
</compile_context>

<pallas_src>
import jax
import jax.numpy as jnp
import numpy as np
from jax.experimental import pallas as pl
from jax.experimental.pallas import tpu as pltpu


# Tap order is row-major over (dh, dw) in {-1,0,1}^2, i.e. (kh, kw) row-major.
_TAPS = [(kh - 1, kw - 1) for kh in range(3) for kw in range(3)]
_CENTER = 4  # (dh, dw) == (0, 0)


# ---------------------------------------------------------------------------
# Static boundary masks (SAME padding), computed host-side once.
# ---------------------------------------------------------------------------

def _make_boundary_masks(H, W):
    """(8, H*W) f32 masks for the 8 off-centre taps; 1.0 where the shifted
    input position lies inside the image, 0.0 where "SAME" padding applies."""
    h = np.arange(H)[:, None]
    w = np.arange(W)[None, :]
    masks = []
    for dh, dw in _TAPS:
        if dh == 0 and dw == 0:
            continue
        valid = (h + dh >= 0) & (h + dh < H) & (w + dw >= 0) & (w + dw < W)
        masks.append(valid.reshape(-1))
    return np.stack(masks).astype(np.float32)


# ---------------------------------------------------------------------------
# Fused kernel (one image per grid step)
# ---------------------------------------------------------------------------

def _make_basic_block_kernel(H, W, C):
    HW = H * W

    def kernel(mask_ref, x_ref, w1_ref, b1_ref, w2_ref, b2_ref, out_ref):
        xf = x_ref[...]                                   # (C, HW) f32 residual
        masks = mask_ref[...]                             # (8, HW) f32

        def conv3x3(act, w_ref):
            # Per-tap accumulation: 9 small bf16 MXU matmuls, f32 accumulation.
            # No im2col scratch -> no vector-store round-trip through VMEM.
            acc = jnp.dot(w_ref[_CENTER], act.astype(jnp.bfloat16),
                          preferred_element_type=jnp.float32)
            m = 0
            for t, (dh, dw) in enumerate(_TAPS):
                if dh == 0 and dw == 0:
                    continue
                # col[i] = act[i + dh*W + dw]; wrap at image edges is zeroed
                # by the static mask (this realises padding=1 exactly).
                shift = (-(dh * W + dw)) % HW
                col = pltpu.roll(act, shift, axis=1) * masks[m:m + 1, :]
                acc += jnp.dot(w_ref[t], col.astype(jnp.bfloat16),
                               preferred_element_type=jnp.float32)
                m += 1
            return acc                                    # (C, HW) f32

        # conv1 + bn1 + relu   (bn1 scale pre-folded into w1; f32 epilogue)
        y = jnp.maximum(conv3x3(xf, w1_ref) + b1_ref[...], 0.0)
        # conv2 + bn2          (bn2 scale pre-folded into w2)
        y = conv3x3(y, w2_ref) + b2_ref[...]
        # out += residual ; out = relu(out) ; out = add_relu(out, residual)
        # (two residual adds: exactly what the PyTorch forward does)
        y = jnp.maximum(y + xf, 0.0)
        out_ref[...] = jnp.maximum(y + xf, 0.0)

    return kernel


# ---------------------------------------------------------------------------
# Wrapper: BN folding, weight layout, pallas_call
# ---------------------------------------------------------------------------

def _fold_bn(gamma, beta, mean, var, eps=1e-5):
    scale = gamma / jnp.sqrt(var + eps)
    return scale, beta - mean * scale


def _prep_weight(w_oihw, scale):
    """PyTorch (Cout, Cin, 3, 3) -> (9, Cout, Cin) bf16, BN scale folded in."""
    cout, cin = w_oihw.shape[0], w_oihw.shape[1]
    w_taps = jnp.transpose(w_oihw, (2, 3, 0, 1)).reshape(9, cout, cin)
    return (w_taps * scale[None, :, None]).astype(jnp.bfloat16)


def basic_block_forward_flat(xf, params, *, H, W):
    """Fused BasicBlock on channel-major flat activations (C, N*H*W).

    Keep this layout persistent across chained BasicBlocks: the kernel is
    input/output symmetric in it, so consecutive blocks need zero transposes.
    """
    C, L = xf.shape
    HW = H * W
    N = L // HW

    s1, b1 = _fold_bn(*params["bn1"])
    s2, b2 = _fold_bn(*params["bn2"])
    w1 = _prep_weight(params["w1"], s1)
    w2 = _prep_weight(params["w2"], s2)
    masks = jnp.asarray(_make_boundary_masks(H, W))       # compile-time constant

    return pl.pallas_call(
        _make_basic_block_kernel(H, W, C),
        out_shape=jax.ShapeDtypeStruct((C, L), jnp.float32),
        grid=(N,),
        in_specs=[
            pl.BlockSpec((8, HW), lambda n: (0, 0)),       # boundary masks
            pl.BlockSpec((C, HW), lambda n: (0, n)),       # activations (per image)
            pl.BlockSpec((9, C, C), lambda n: (0, 0, 0)),  # w1 taps (bf16)
            pl.BlockSpec((C, 1), lambda n: (0, 0)),        # b1
            pl.BlockSpec((9, C, C), lambda n: (0, 0, 0)),  # w2 taps (bf16)
            pl.BlockSpec((C, 1), lambda n: (0, 0)),        # b2
        ],
        out_specs=pl.BlockSpec((C, HW), lambda n: (0, n)),
        compiler_params=pltpu.CompilerParams(
            dimension_semantics=("parallel",)),            # megacore on v7x
    )(masks, xf, w1, b1.reshape(C, 1), w2, b2.reshape(C, 1))


@jax.jit
def basic_block_forward(x_nchw, params):
    """NCHW convenience wrapper (the flat entry point avoids these transposes
    when BasicBlocks are chained)."""
    N, C, H, W = x_nchw.shape
    xf = jnp.transpose(x_nchw, (1, 0, 2, 3)).reshape(C, N * H * W)
    out = basic_block_forward_flat(xf, params, H=H, W=W)
    return jnp.transpose(out.reshape(C, N, H, W), (1, 0, 2, 3))


# ---------------------------------------------------------------------------
# Pure-JAX f32 reference (correctness check)
# ---------------------------------------------------------------------------

def _ref_conv3x3(x_nhwc, w_hwio):
    return jax.lax.conv_general_dilated(
        x_nhwc, w_hwio, window_strides=(1, 1), padding="SAME",
        dimension_numbers=("NHWC", "HWIO", "NHWC"),
        precision=jax.lax.Precision.HIGHEST)


def reference_forward(x_nchw, params):
    x = jnp.transpose(x_nchw, (0, 2, 3, 1))                  # NCHW -> NHWC
    s1, b1 = _fold_bn(*params["bn1"])
    s2, b2 = _fold_bn(*params["bn2"])
    w1 = jnp.transpose(params["w1"], (2, 3, 1, 0))           # OIHW -> HWIO
    w2 = jnp.transpose(params["w2"], (2, 3, 1, 0))
    out = jnp.maximum(_ref_conv3x3(x, w1) * s1 + b1, 0.0)
    out = _ref_conv3x3(out, w2) * s2 + b2
    out = jnp.maximum(out + x, 0.0)                          # out += res; relu
    out = jnp.maximum(out + x, 0.0)                          # add_relu(out, res)
    return jnp.transpose(out, (0, 3, 1, 2))                  # NHWC -> NCHW


# ---------------------------------------------------------------------------
# main
# ---------------------------------------------------------------------------

if __name__ == "__main__":
    N, C, H, W = 2, 4, 16, 16            # inplanes = planes = 4, stride = 1
    key = jax.random.PRNGKey(0)
    ks = jax.random.split(key, 12)

    x = jax.random.normal(ks[0], (N, C, H, W), jnp.float32)

    # conv weights kept in PyTorch layout (Cout, Cin, 3, 3); wrapper converts.
    w1 = jax.random.normal(ks[1], (C, C, 3, 3), jnp.float32) * 0.1
    w2 = jax.random.normal(ks[2], (C, C, 3, 3), jnp.float32) * 0.1

    # BatchNorm (eval mode): gamma, beta, running_mean, running_var
    bn1 = (jax.random.uniform(ks[3], (C,), jnp.float32, 0.5, 1.5),
           jax.random.normal(ks[4], (C,), jnp.float32) * 0.1,
           jax.random.normal(ks[5], (C,), jnp.float32) * 0.1,
           jax.random.uniform(ks[6], (C,), jnp.float32, 0.5, 1.5))
    bn2 = (jax.random.uniform(ks[7], (C,), jnp.float32, 0.5, 1.5),
           jax.random.normal(ks[8], (C,), jnp.float32) * 0.1,
           jax.random.normal(ks[9], (C,), jnp.float32) * 0.1,
           jax.random.uniform(ks[10], (C,), jnp.float32, 0.5, 1.5))

    params = {"w1": w1, "w2": w2, "bn1": bn1, "bn2": bn2}

    out = jax.block_until_ready(basic_block_forward(x, params))
    ref = jax.block_until_ready(reference_forward(x, params))

    assert out.shape == (N, C, H, W), out.shape
    # bf16 MXU operands (f32 accumulation): tolerance relaxed vs. pure-f32 ref.
    err_max = float(jnp.max(jnp.abs(out - ref)))
    err_mean = float(jnp.mean(jnp.abs(out - ref)))
    assert err_max < 1e-1 and err_mean < 1e-2, (err_max, err_mean)

    print("KERNEL_OK")
</pallas_src>

<mosaic_0001>
module attributes {stable_mosaic.version = 11 : i64} {
  func.func @kernel(%arg0: i32, %arg1: memref<8x256xf32, #tpu.memory_space<vmem>>, %arg2: memref<4x256xf32, #tpu.memory_space<vmem>>, %arg3: memref<9x4x4xbf16, #tpu.memory_space<vmem>>, %arg4: memref<4x1xf32, #tpu.memory_space<vmem>>, %arg5: memref<9x4x4xbf16, #tpu.memory_space<vmem>>, %arg6: memref<4x1xf32, #tpu.memory_space<vmem>>, %arg7: memref<4x256xf32, #tpu.memory_space<vmem>>) attributes {dimension_semantics = [#tpu.dimension_semantics<parallel>], iteration_bounds = array<i64: 2>, scalar_prefetch = 0 : i64, scratch_operands = 0 : i64, tpu.core_type = #tpu.core_type<tc>, window_params = [{pipeline_mode = #tpu.pipeline_mode<synchronous>, transform_indices = @transform_0, window_bounds = array<i64: 8, 256>}, {transform_indices = @transform_1, window_bounds = array<i64: 4, 256>}, {pipeline_mode = #tpu.pipeline_mode<synchronous>, transform_indices = @transform_2, window_bounds = array<i64: 9, 4, 4>}, {pipeline_mode = #tpu.pipeline_mode<synchronous>, transform_indices = @transform_3, window_bounds = array<i64: 4, 1>}, {pipeline_mode = #tpu.pipeline_mode<synchronous>, transform_indices = @transform_4, window_bounds = array<i64: 9, 4, 4>}, {pipeline_mode = #tpu.pipeline_mode<synchronous>, transform_indices = @transform_5, window_bounds = array<i64: 4, 1>}, {transform_indices = @transform_6, window_bounds = array<i64: 4, 256>}]} {
    %c0 = arith.constant 0 : index
    %c0_0 = arith.constant 0 : index
    %0 = vector.load %arg2[%c0, %c0_0] : memref<4x256xf32, #tpu.memory_space<vmem>>, vector<4x256xf32>
    %c0_1 = arith.constant 0 : index
    %c0_2 = arith.constant 0 : index
    %1 = vector.load %arg1[%c0_1, %c0_2] : memref<8x256xf32, #tpu.memory_space<vmem>>, vector<8x256xf32>
    %c4 = arith.constant 4 : index
    %c0_3 = arith.constant 0 : index
    %c0_4 = arith.constant 0 : index
    %2 = vector.load %arg3[%c4, %c0_3, %c0_4] : memref<9x4x4xbf16, #tpu.memory_space<vmem>>, vector<1x4x4xbf16>
    %3 = vector.shape_cast %2 : vector<1x4x4xbf16> to vector<4x4xbf16>
    %4 = arith.truncf %0 : vector<4x256xf32> to vector<4x256xbf16>
    %cst = arith.constant dense<0.000000e+00> : vector<4x256xf32>
    %5 = tpu.matmul %3, %4, %cst {dimension_numbers = #tpu.dot_dimension_numbers<[1], [0], [0], [1], [0, 0, 1, 1], [], []>} : vector<4x4xbf16>, vector<4x256xbf16>, vector<4x256xf32> -> vector<4x256xf32>
    %c17_i32 = arith.constant 17 : i32
    %6 = tpu.dynamic_rotate %0 by %c17_i32 dim 1 : vector<4x256xf32>, i32 -> vector<4x256xf32>
    %7 = vector.extract_strided_slice %1 {offsets = [0, 0], sizes = [1, 256], strides = [1, 1]} : vector<8x256xf32> to vector<1x256xf32>
    %8 = vector.broadcast %7 : vector<1x256xf32> to vector<4x256xf32>
    %9 = arith.mulf %6, %8 : vector<4x256xf32>
    %c0_5 = arith.constant 0 : index
    %c0_6 = arith.constant 0 : index
    %c0_7 = arith.constant 0 : index
    %10 = vector.load %arg3[%c0_5, %c0_6, %c0_7] : memref<9x4x4xbf16, #tpu.memory_space<vmem>>, vector<1x4x4xbf16>
    %11 = vector.shape_cast %10 : vector<1x4x4xbf16> to vector<4x4xbf16>
    %12 = arith.truncf %9 : vector<4x256xf32> to vector<4x256xbf16>
    %cst_8 = arith.constant dense<0.000000e+00> : vector<4x256xf32>
    %13 = tpu.matmul %11, %12, %cst_8 {dimension_numbers = #tpu.dot_dimension_numbers<[1], [0], [0], [1], [0, 0, 1, 1], [], []>} : vector<4x4xbf16>, vector<4x256xbf16>, vector<4x256xf32> -> vector<4x256xf32>
    %14 = arith.addf %5, %13 : vector<4x256xf32>
    %c16_i32 = arith.constant 16 : i32
    %15 = tpu.dynamic_rotate %0 by %c16_i32 dim 1 : vector<4x256xf32>, i32 -> vector<4x256xf32>
    %16 = vector.extract_strided_slice %1 {offsets = [1, 0], sizes = [1, 256], strides = [1, 1]} : vector<8x256xf32> to vector<1x256xf32>
    %17 = vector.broadcast %16 : vector<1x256xf32> to vector<4x256xf32>
    %18 = arith.mulf %15, %17 : vector<4x256xf32>
    %c1 = arith.constant 1 : index
    %c0_9 = arith.constant 0 : index
    %c0_10 = arith.constant 0 : index
    %19 = vector.load %arg3[%c1, %c0_9, %c0_10] : memref<9x4x4xbf16, #tpu.memory_space<vmem>>, vector<1x4x4xbf16>
    %20 = vector.shape_cast %19 : vector<1x4x4xbf16> to vector<4x4xbf16>
    %21 = arith.truncf %18 : vector<4x256xf32> to vector<4x256xbf16>
    %cst_11 = arith.constant dense<0.000000e+00> : vector<4x256xf32>
    %22 = tpu.matmul %20, %21, %cst_11 {dimension_numbers = #tpu.dot_dimension_numbers<[1], [0], [0], [1], [0, 0, 1, 1], [], []>} : vector<4x4xbf16>, vector<4x256xbf16>, vector<4x256xf32> -> vector<4x256xf32>
    %23 = arith.addf %14, %22 : vector<4x256xf32>
    %c15_i32 = arith.constant 15 : i32
    %24 = tpu.dynamic_rotate %0 by %c15_i32 dim 1 : vector<4x256xf32>, i32 -> vector<4x256xf32>
    %25 = vector.extract_strided_slice %1 {offsets = [2, 0], sizes = [1, 256], strides = [1, 1]} : vector<8x256xf32> to vector<1x256xf32>
    %26 = vector.broadcast %25 : vector<1x256xf32> to vector<4x256xf32>
    %27 = arith.mulf %24, %26 : vector<4x256xf32>
    %c2 = arith.constant 2 : index
    %c0_12 = arith.constant 0 : index
    %c0_13 = arith.constant 0 : index
    %28 = vector.load %arg3[%c2, %c0_12, %c0_13] : memref<9x4x4xbf16, #tpu.memory_space<vmem>>, vector<1x4x4xbf16>
    %29 = vector.shape_cast %28 : vector<1x4x4xbf16> to vector<4x4xbf16>
    %30 = arith.truncf %27 : vector<4x256xf32> to vector<4x256xbf16>
    %cst_14 = arith.constant dense<0.000000e+00> : vector<4x256xf32>
    %31 = tpu.matmul %29, %30, %cst_14 {dimension_numbers = #tpu.dot_dimension_numbers<[1], [0], [0], [1], [0, 0, 1, 1], [], []>} : vector<4x4xbf16>, vector<4x256xbf16>, vector<4x256xf32> -> vector<4x256xf32>
    %32 = arith.addf %23, %31 : vector<4x256xf32>
    %c1_i32 = arith.constant 1 : i32
    %33 = tpu.dynamic_rotate %0 by %c1_i32 dim 1 : vector<4x256xf32>, i32 -> vector<4x256xf32>
    %34 = vector.extract_strided_slice %1 {offsets = [3, 0], sizes = [1, 256], strides = [1, 1]} : vector<8x256xf32> to vector<1x256xf32>
    %35 = vector.broadcast %34 : vector<1x256xf32> to vector<4x256xf32>
    %36 = arith.mulf %33, %35 : vector<4x256xf32>
    %c3 = arith.constant 3 : index
    %c0_15 = arith.constant 0 : index
    %c0_16 = arith.constant 0 : index
    %37 = vector.load %arg3[%c3, %c0_15, %c0_16] : memref<9x4x4xbf16, #tpu.memory_space<vmem>>, vector<1x4x4xbf16>
    %38 = vector.shape_cast %37 : vector<1x4x4xbf16> to vector<4x4xbf16>
    %39 = arith.truncf %36 : vector<4x256xf32> to vector<4x256xbf16>
    %cst_17 = arith.constant dense<0.000000e+00> : vector<4x256xf32>
    %40 = tpu.matmul %38, %39, %cst_17 {dimension_numbers = #tpu.dot_dimension_numbers<[1], [0], [0], [1], [0, 0, 1, 1], [], []>} : vector<4x4xbf16>, vector<4x256xbf16>, vector<4x256xf32> -> vector<4x256xf32>
    %41 = arith.addf %32, %40 : vector<4x256xf32>
    %c255_i32 = arith.constant 255 : i32
    %42 = tpu.dynamic_rotate %0 by %c255_i32 dim 1 : vector<4x256xf32>, i32 -> vector<4x256xf32>
    %43 = vector.extract_strided_slice %1 {offsets = [4, 0], sizes = [1, 256], strides = [1, 1]} : vector<8x256xf32> to vector<1x256xf32>
    %44 = vector.broadcast %43 : vector<1x256xf32> to vector<4x256xf32>
    %45 = arith.mulf %42, %44 : vector<4x256xf32>
    %c5 = arith.constant 5 : index
    %c0_18 = arith.constant 0 : index
    %c0_19 = arith.constant 0 : index
    %46 = vector.load %arg3[%c5, %c0_18, %c0_19] : memref<9x4x4xbf16, #tpu.memory_space<vmem>>, vector<1x4x4xbf16>
    %47 = vector.shape_cast %46 : vector<1x4x4xbf16> to vector<4x4xbf16>
    %48 = arith.truncf %45 : vector<4x256xf32> to vector<4x256xbf16>
    %cst_20 = arith.constant dense<0.000000e+00> : vector<4x256xf32>
    %49 = tpu.matmul %47, %48, %cst_20 {dimension_numbers = #tpu.dot_dimension_numbers<[1], [0], [0], [1], [0, 0, 1, 1], [], []>} : vector<4x4xbf16>, vector<4x256xbf16>, vector<4x256xf32> -> vector<4x256xf32>
    %50 = arith.addf %41, %49 : vector<4x256xf32>
    %c241_i32 = arith.constant 241 : i32
    %51 = tpu.dynamic_rotate %0 by %c241_i32 dim 1 : vector<4x256xf32>, i32 -> vector<4x256xf32>
    %52 = vector.extract_strided_slice %1 {offsets = [5, 0], sizes = [1, 256], strides = [1, 1]} : vector<8x256xf32> to vector<1x256xf32>
    %53 = vector.broadcast %52 : vector<1x256xf32> to vector<4x256xf32>
    %54 = arith.mulf %51, %53 : vector<4x256xf32>
    %c6 = arith.constant 6 : index
    %c0_21 = arith.constant 0 : index
    %c0_22 = arith.constant 0 : index
    %55 = vector.load %arg3[%c6, %c0_21, %c0_22] : memref<9x4x4xbf16, #tpu.memory_space<vmem>>, vector<1x4x4xbf16>
    %56 = vector.shape_cast %55 : vector<1x4x4xbf16> to vector<4x4xbf16>
    %57 = arith.truncf %54 : vector<4x256xf32> to vector<4x256xbf16>
    %cst_23 = arith.constant dense<0.000000e+00> : vector<4x256xf32>
    %58 = tpu.matmul %56, %57, %cst_23 {dimension_numbers = #tpu.dot_dimension_numbers<[1], [0], [0], [1], [0, 0, 1, 1], [], []>} : vector<4x4xbf16>, vector<4x256xbf16>, vector<4x256xf32> -> vector<4x256xf32>
    %59 = arith.addf %50, %58 : vector<4x256xf32>
    %c240_i32 = arith.constant 240 : i32
    %60 = tpu.dynamic_rotate %0 by %c240_i32 dim 1 : vector<4x256xf32>, i32 -> vector<4x256xf32>
    %61 = vector.extract_strided_slice %1 {offsets = [6, 0], sizes = [1, 256], strides = [1, 1]} : vector<8x256xf32> to vector<1x256xf32>
    %62 = vector.broadcast %61 : vector<1x256xf32> to vector<4x256xf32>
    %63 = arith.mulf %60, %62 : vector<4x256xf32>
    %c7 = arith.constant 7 : index
    %c0_24 = arith.constant 0 : index
    %c0_25 = arith.constant 0 : index
    %64 = vector.load %arg3[%c7, %c0_24, %c0_25] : memref<9x4x4xbf16, #tpu.memory_space<vmem>>, vector<1x4x4xbf16>
    %65 = vector.shape_cast %64 : vector<1x4x4xbf16> to vector<4x4xbf16>
    %66 = arith.truncf %63 : vector<4x256xf32> to vector<4x256xbf16>
    %cst_26 = arith.constant dense<0.000000e+00> : vector<4x256xf32>
    %67 = tpu.matmul %65, %66, %cst_26 {dimension_numbers = #tpu.dot_dimension_numbers<[1], [0], [0], [1], [0, 0, 1, 1], [], []>} : vector<4x4xbf16>, vector<4x256xbf16>, vector<4x256xf32> -> vector<4x256xf32>
    %68 = arith.addf %59, %67 : vector<4x256xf32>
    %c239_i32 = arith.constant 239 : i32
    %69 = tpu.dynamic_rotate %0 by %c239_i32 dim 1 : vector<4x256xf32>, i32 -> vector<4x256xf32>
    %70 = vector.extract_strided_slice %1 {offsets = [7, 0], sizes = [1, 256], strides = [1, 1]} : vector<8x256xf32> to vector<1x256xf32>
    %71 = vector.broadcast %70 : vector<1x256xf32> to vector<4x256xf32>
    %72 = arith.mulf %69, %71 : vector<4x256xf32>
    %c8 = arith.constant 8 : index
    %c0_27 = arith.constant 0 : index
    %c0_28 = arith.constant 0 : index
    %73 = vector.load %arg3[%c8, %c0_27, %c0_28] : memref<9x4x4xbf16, #tpu.memory_space<vmem>>, vector<1x4x4xbf16>
    %74 = vector.shape_cast %73 : vector<1x4x4xbf16> to vector<4x4xbf16>
    %75 = arith.truncf %72 : vector<4x256xf32> to vector<4x256xbf16>
    %cst_29 = arith.constant dense<0.000000e+00> : vector<4x256xf32>
    %76 = tpu.matmul %74, %75, %cst_29 {dimension_numbers = #tpu.dot_dimension_numbers<[1], [0], [0], [1], [0, 0, 1, 1], [], []>} : vector<4x4xbf16>, vector<4x256xbf16>, vector<4x256xf32> -> vector<4x256xf32>
    %77 = arith.addf %68, %76 : vector<4x256xf32>
    %c0_30 = arith.constant 0 : index
    %c0_31 = arith.constant 0 : index
    %78 = vector.load %arg4[%c0_30, %c0_31] : memref<4x1xf32, #tpu.memory_space<vmem>>, vector<4x1xf32>
    %79 = vector.broadcast %78 : vector<4x1xf32> to vector<4x256xf32>
    %80 = arith.addf %77, %79 : vector<4x256xf32>
    %cst_32 = arith.constant 0.000000e+00 : f32
    %81 = vector.broadcast %cst_32 : f32 to vector<4x256xf32>
    %82 = arith.maximumf %80, %81 : vector<4x256xf32>
    %c4_33 = arith.constant 4 : index
    %c0_34 = arith.constant 0 : index
    %c0_35 = arith.constant 0 : index
    %83 = vector.load %arg5[%c4_33, %c0_34, %c0_35] : memref<9x4x4xbf16, #tpu.memory_space<vmem>>, vector<1x4x4xbf16>
    %84 = vector.shape_cast %83 : vector<1x4x4xbf16> to vector<4x4xbf16>
    %85 = arith.truncf %82 : vector<4x256xf32> to vector<4x256xbf16>
    %cst_36 = arith.constant dense<0.000000e+00> : vector<4x256xf32>
    %86 = tpu.matmul %84, %85, %cst_36 {dimension_numbers = #tpu.dot_dimension_numbers<[1], [0], [0], [1], [0, 0, 1, 1], [], []>} : vector<4x4xbf16>, vector<4x256xbf16>, vector<4x256xf32> -> vector<4x256xf32>
    %c17_i32_37 = arith.constant 17 : i32
    %87 = tpu.dynamic_rotate %82 by %c17_i32_37 dim 1 : vector<4x256xf32>, i32 -> vector<4x256xf32>
    %88 = vector.extract_strided_slice %1 {offsets = [0, 0], sizes = [1, 256], strides = [1, 1]} : vector<8x256xf32> to vector<1x256xf32>
    %89 = vector.broadcast %88 : vector<1x256xf32> to vector<4x256xf32>
    %90 = arith.mulf %87, %89 : vector<4x256xf32>
    %c0_38 = arith.constant 0 : index
    %c0_39 = arith.constant 0 : index
    %c0_40 = arith.constant 0 : index
    %91 = vector.load %arg5[%c0_38, %c0_39, %c0_40] : memref<9x4x4xbf16, #tpu.memory_space<vmem>>, vector<1x4x4xbf16>
    %92 = vector.shape_cast %91 : vector<1x4x4xbf16> to vector<4x4xbf16>
    %93 = arith.truncf %90 : vector<4x256xf32> to vector<4x256xbf16>
    %cst_41 = arith.constant dense<0.000000e+00> : vector<4x256xf32>
    %94 = tpu.matmul %92, %93, %cst_41 {dimension_numbers = #tpu.dot_dimension_numbers<[1], [0], [0], [1], [0, 0, 1, 1], [], []>} : vector<4x4xbf16>, vector<4x256xbf16>, vector<4x256xf32> -> vector<4x256xf32>
    %95 = arith.addf %86, %94 : vector<4x256xf32>
    %c16_i32_42 = arith.constant 16 : i32
    %96 = tpu.dynamic_rotate %82 by %c16_i32_42 dim 1 : vector<4x256xf32>, i32 -> vector<4x256xf32>
    %97 = vector.extract_strided_slice %1 {offsets = [1, 0], sizes = [1, 256], strides = [1, 1]} : vector<8x256xf32> to vector<1x256xf32>
    %98 = vector.broadcast %97 : vector<1x256xf32> to vector<4x256xf32>
    %99 = arith.mulf %96, %98 : vector<4x256xf32>
    %c1_43 = arith.constant 1 : index
    %c0_44 = arith.constant 0 : index
    %c0_45 = arith.constant 0 : index
    %100 = vector.load %arg5[%c1_43, %c0_44, %c0_45] : memref<9x4x4xbf16, #tpu.memory_space<vmem>>, vector<1x4x4xbf16>
    %101 = vector.shape_cast %100 : vector<1x4x4xbf16> to vector<4x4xbf16>
    %102 = arith.truncf %99 : vector<4x256xf32> to vector<4x256xbf16>
    %cst_46 = arith.constant dense<0.000000e+00> : vector<4x256xf32>
    %103 = tpu.matmul %101, %102, %cst_46 {dimension_numbers = #tpu.dot_dimension_numbers<[1], [0], [0], [1], [0, 0, 1, 1], [], []>} : vector<4x4xbf16>, vector<4x256xbf16>, vector<4x256xf32> -> vector<4x256xf32>
    %104 = arith.addf %95, %103 : vector<4x256xf32>
    %c15_i32_47 = arith.constant 15 : i32
    %105 = tpu.dynamic_rotate %82 by %c15_i32_47 dim 1 : vector<4x256xf32>, i32 -> vector<4x256xf32>
    %106 = vector.extract_strided_slice %1 {offsets = [2, 0], sizes = [1, 256], strides = [1, 1]} : vector<8x256xf32> to vector<1x256xf32>
    %107 = vector.broadcast %106 : vector<1x256xf32> to vector<4x256xf32>
    %108 = arith.mulf %105, %107 : vector<4x256xf32>
    %c2_48 = arith.constant 2 : index
    %c0_49 = arith.constant 0 : index
    %c0_50 = arith.constant 0 : index
    %109 = vector.load %arg5[%c2_48, %c0_49, %c0_50] : memref<9x4x4xbf16, #tpu.memory_space<vmem>>, vector<1x4x4xbf16>
    %110 = vector.shape_cast %109 : vector<1x4x4xbf16> to vector<4x4xbf16>
    %111 = arith.truncf %108 : vector<4x256xf32> to vector<4x256xbf16>
    %cst_51 = arith.constant dense<0.000000e+00> : vector<4x256xf32>
    %112 = tpu.matmul %110, %111, %cst_51 {dimension_numbers = #tpu.dot_dimension_numbers<[1], [0], [0], [1], [0, 0, 1, 1], [], []>} : vector<4x4xbf16>, vector<4x256xbf16>, vector<4x256xf32> -> vector<4x256xf32>
    %113 = arith.addf %104, %112 : vector<4x256xf32>
    %c1_i32_52 = arith.constant 1 : i32
    %114 = tpu.dynamic_rotate %82 by %c1_i32_52 dim 1 : vector<4x256xf32>, i32 -> vector<4x256xf32>
    %115 = vector.extract_strided_slice %1 {offsets = [3, 0], sizes = [1, 256], strides = [1, 1]} : vector<8x256xf32> to vector<1x256xf32>
    %116 = vector.broadcast %115 : vector<1x256xf32> to vector<4x256xf32>
    %117 = arith.mulf %114, %116 : vector<4x256xf32>
    %c3_53 = arith.constant 3 : index
    %c0_54 = arith.constant 0 : index
    %c0_55 = arith.constant 0 : index
    %118 = vector.load %arg5[%c3_53, %c0_54, %c0_55] : memref<9x4x4xbf16, #tpu.memory_space<vmem>>, vector<1x4x4xbf16>
    %119 = vector.shape_cast %118 : vector<1x4x4xbf16> to vector<4x4xbf16>
    %120 = arith.truncf %117 : vector<4x256xf32> to vector<4x256xbf16>
    %cst_56 = arith.constant dense<0.000000e+00> : vector<4x256xf32>
    %121 = tpu.matmul %119, %120, %cst_56 {dimension_numbers = #tpu.dot_dimension_numbers<[1], [0], [0], [1], [0, 0, 1, 1], [], []>} : vector<4x4xbf16>, vector<4x256xbf16>, vector<4x256xf32> -> vector<4x256xf32>
    %122 = arith.addf %113, %121 : vector<4x256xf32>
    %c255_i32_57 = arith.constant 255 : i32
    %123 = tpu.dynamic_rotate %82 by %c255_i32_57 dim 1 : vector<4x256xf32>, i32 -> vector<4x256xf32>
    %124 = vector.extract_strided_slice %1 {offsets = [4, 0], sizes = [1, 256], strides = [1, 1]} : vector<8x256xf32> to vector<1x256xf32>
    %125 = vector.broadcast %124 : vector<1x256xf32> to vector<4x256xf32>
    %126 = arith.mulf %123, %125 : vector<4x256xf32>
    %c5_58 = arith.constant 5 : index
    %c0_59 = arith.constant 0 : index
    %c0_60 = arith.constant 0 : index
    %127 = vector.load %arg5[%c5_58, %c0_59, %c0_60] : memref<9x4x4xbf16, #tpu.memory_space<vmem>>, vector<1x4x4xbf16>
    %128 = vector.shape_cast %127 : vector<1x4x4xbf16> to vector<4x4xbf16>
    %129 = arith.truncf %126 : vector<4x256xf32> to vector<4x256xbf16>
    %cst_61 = arith.constant dense<0.000000e+00> : vector<4x256xf32>
    %130 = tpu.matmul %128, %129, %cst_61 {dimension_numbers = #tpu.dot_dimension_numbers<[1], [0], [0], [1], [0, 0, 1, 1], [], []>} : vector<4x4xbf16>, vector<4x256xbf16>, vector<4x256xf32> -> vector<4x256xf32>
    %131 = arith.addf %122, %130 : vector<4x256xf32>
    %c241_i32_62 = arith.constant 241 : i32
    %132 = tpu.dynamic_rotate %82 by %c241_i32_62 dim 1 : vector<4x256xf32>, i32 -> vector<4x256xf32>
    %133 = vector.extract_strided_slice %1 {offsets = [5, 0], sizes = [1, 256], strides = [1, 1]} : vector<8x256xf32> to vector<1x256xf32>
    %134 = vector.broadcast %133 : vector<1x256xf32> to vector<4x256xf32>
    %135 = arith.mulf %132, %134 : vector<4x256xf32>
    %c6_63 = arith.constant 6 : index
    %c0_64 = arith.constant 0 : index
    %c0_65 = arith.constant 0 : index
    %136 = vector.load %arg5[%c6_63, %c0_64, %c0_65] : memref<9x4x4xbf16, #tpu.memory_space<vmem>>, vector<1x4x4xbf16>
    %137 = vector.shape_cast %136 : vector<1x4x4xbf16> to vector<4x4xbf16>
    %138 = arith.truncf %135 : vector<4x256xf32> to vector<4x256xbf16>
    %cst_66 = arith.constant dense<0.000000e+00> : vector<4x256xf32>
    %139 = tpu.matmul %137, %138, %cst_66 {dimension_numbers = #tpu.dot_dimension_numbers<[1], [0], [0], [1], [0, 0, 1, 1], [], []>} : vector<4x4xbf16>, vector<4x256xbf16>, vector<4x256xf32> -> vector<4x256xf32>
    %140 = arith.addf %131, %139 : vector<4x256xf32>
    %c240_i32_67 = arith.constant 240 : i32
    %141 = tpu.dynamic_rotate %82 by %c240_i32_67 dim 1 : vector<4x256xf32>, i32 -> vector<4x256xf32>
    %142 = vector.extract_strided_slice %1 {offsets = [6, 0], sizes = [1, 256], strides = [1, 1]} : vector<8x256xf32> to vector<1x256xf32>
    %143 = vector.broadcast %142 : vector<1x256xf32> to vector<4x256xf32>
    %144 = arith.mulf %141, %143 : vector<4x256xf32>
    %c7_68 = arith.constant 7 : index
    %c0_69 = arith.constant 0 : index
    %c0_70 = arith.constant 0 : index
    %145 = vector.load %arg5[%c7_68, %c0_69, %c0_70] : memref<9x4x4xbf16, #tpu.memory_space<vmem>>, vector<1x4x4xbf16>
    %146 = vector.shape_cast %145 : vector<1x4x4xbf16> to vector<4x4xbf16>
    %147 = arith.truncf %144 : vector<4x256xf32> to vector<4x256xbf16>
    %cst_71 = arith.constant dense<0.000000e+00> : vector<4x256xf32>
    %148 = tpu.matmul %146, %147, %cst_71 {dimension_numbers = #tpu.dot_dimension_numbers<[1], [0], [0], [1], [0, 0, 1, 1], [], []>} : vector<4x4xbf16>, vector<4x256xbf16>, vector<4x256xf32> -> vector<4x256xf32>
    %149 = arith.addf %140, %148 : vector<4x256xf32>
    %c239_i32_72 = arith.constant 239 : i32
    %150 = tpu.dynamic_rotate %82 by %c239_i32_72 dim 1 : vector<4x256xf32>, i32 -> vector<4x256xf32>
    %151 = vector.extract_strided_slice %1 {offsets = [7, 0], sizes = [1, 256], strides = [1, 1]} : vector<8x256xf32> to vector<1x256xf32>
    %152 = vector.broadcast %151 : vector<1x256xf32> to vector<4x256xf32>
    %153 = arith.mulf %150, %152 : vector<4x256xf32>
    %c8_73 = arith.constant 8 : index
    %c0_74 = arith.constant 0 : index
    %c0_75 = arith.constant 0 : index
    %154 = vector.load %arg5[%c8_73, %c0_74, %c0_75] : memref<9x4x4xbf16, #tpu.memory_space<vmem>>, vector<1x4x4xbf16>
    %155 = vector.shape_cast %154 : vector<1x4x4xbf16> to vector<4x4xbf16>
    %156 = arith.truncf %153 : vector<4x256xf32> to vector<4x256xbf16>
    %cst_76 = arith.constant dense<0.000000e+00> : vector<4x256xf32>
    %157 = tpu.matmul %155, %156, %cst_76 {dimension_numbers = #tpu.dot_dimension_numbers<[1], [0], [0], [1], [0, 0, 1, 1], [], []>} : vector<4x4xbf16>, vector<4x256xbf16>, vector<4x256xf32> -> vector<4x256xf32>
    %158 = arith.addf %149, %157 : vector<4x256xf32>
    %c0_77 = arith.constant 0 : index
    %c0_78 = arith.constant 0 : index
    %159 = vector.load %arg6[%c0_77, %c0_78] : memref<4x1xf32, #tpu.memory_space<vmem>>, vector<4x1xf32>
    %160 = vector.broadcast %159 : vector<4x1xf32> to vector<4x256xf32>
    %161 = arith.addf %158, %160 : vector<4x256xf32>
    %162 = arith.addf %161, %0 : vector<4x256xf32>
    %cst_79 = arith.constant 0.000000e+00 : f32
    %163 = vector.broadcast %cst_79 : f32 to vector<4x256xf32>
    %164 = arith.maximumf %162, %163 : vector<4x256xf32>
    %165 = arith.addf %164, %0 : vector<4x256xf32>
    %cst_80 = arith.constant 0.000000e+00 : f32
    %166 = vector.broadcast %cst_80 : f32 to vector<4x256xf32>
    %167 = arith.maximumf %165, %166 : vector<4x256xf32>
    %c0_81 = arith.constant 0 : index
    %c0_82 = arith.constant 0 : index
    %168 = vector.load %arg7[%c0_81, %c0_82] : memref<4x256xf32, #tpu.memory_space<vmem>>, vector<4x256xf32>
    tpu.vector_store %arg7[%c0_81, %c0_82], %167 {strides = array<i32>} : memref<4x256xf32, #tpu.memory_space<vmem>>, vector<4x256xf32>,
    return
  }
  func.func @transform_0(%arg0: i32) -> (i32, i32) {
    %c0_i32 = arith.constant 0 : i32
    %c0_i32_0 = arith.constant 0 : i32
    %c0_i32_1 = arith.constant 0 : i32
    return %c0_i32, %c0_i32_0 : i32, i32
  }
  func.func @transform_1(%arg0: i32) -> (i32, i32) {
    %c0_i32 = arith.constant 0 : i32
    %c0_i32_0 = arith.constant 0 : i32
    return %c0_i32, %arg0 : i32, i32
  }
  func.func @transform_2(%arg0: i32) -> (i32, i32, i32) {
    %c0_i32 = arith.constant 0 : i32
    %c0_i32_0 = arith.constant 0 : i32
    %c0_i32_1 = arith.constant 0 : i32
    %c0_i32_2 = arith.constant 0 : i32
    return %c0_i32, %c0_i32_0, %c0_i32_1 : i32, i32, i32
  }
  func.func @transform_3(%arg0: i32) -> (i32, i32) {
    %c0_i32 = arith.constant 0 : i32
    %c0_i32_0 = arith.constant 0 : i32
    %c0_i32_1 = arith.constant 0 : i32
    return %c0_i32, %c0_i32_0 : i32, i32
  }
  func.func @transform_4(%arg0: i32) -> (i32, i32, i32) {
    %c0_i32 = arith.constant 0 : i32
    %c0_i32_0 = arith.constant 0 : i32
    %c0_i32_1 = arith.constant 0 : i32
    %c0_i32_2 = arith.constant 0 : i32
    return %c0_i32, %c0_i32_0, %c0_i32_1 : i32, i32, i32
  }
  func.func @transform_5(%arg0: i32) -> (i32, i32) {
    %c0_i32 = arith.constant 0 : i32
    %c0_i32_0 = arith.constant 0 : i32
    %c0_i32_1 = arith.constant 0 : i32
    return %c0_i32, %c0_i32_0 : i32, i32
  }
  func.func @transform_6(%arg0: i32) -> (i32, i32) {
    %c0_i32 = arith.constant 0 : i32
    %c0_i32_0 = arith.constant 0 : i32
    return %c0_i32, %arg0 : i32, i32
  }
}

</mosaic_0001>

<llo_original>
// kernel: basic_block_forward.1
$region0: #{basic_block_forward.1}
  #allocation0 [shape = 'u32[]', space=smem, size = 0x4, offset = 0x4, fixed_abs, tag = 'smem constant byte address 0x4 - core index']
  #allocation1 [shape = 'u32[72,128]{1,0:T(1,128)}', space=vmem, size = 0x9000, scoped, tag = 'internal scratch']
  %s0 = inlined_call_operand.vmem [shape: f32[8,256], index: 0, kind: input, shape index: {}]
  %s1 = inlined_call_operand.vmem [shape: f32[4,512], index: 1, kind: input, shape index: {}]
  %s2 = inlined_call_operand.vmem [shape: bf16[9,4,4], index: 2, kind: input, shape index: {}]
  %s3 = inlined_call_operand.vmem [shape: f32[4,1], index: 3, kind: input, shape index: {}]
  %s4 = inlined_call_operand.vmem [shape: bf16[9,4,4], index: 4, kind: input, shape index: {}]
  %s5 = inlined_call_operand.vmem [shape: f32[4,1], index: 5, kind: input, shape index: {}]
  %s6 = inlined_call_operand.vmem [shape: f32[4,512], index: 6, kind: output, shape index: {}]
  %s7 = sld [smem:[#allocation0]]
  $region57: #{basic_block_forward.1} parent=0
    _
  %s9 = ssub.s32 1, %s7
  %s10 = scalar_select 0, %s9, %s7
  loop: start=0, step=1, limit=4
  $region2: #{basic_block_forward.1} parent=0 // loop_pre_header
    _
  $region3: #{basic_block_forward.1} parent=0 // loop_header
    %s12 = sphi 0, %s16
    %p13 = scmp.ge.s32.totalorder %s12, 4
    %s20 = sphi 0, %s20
    %s22 = sphi 0, %s20
    %s23 = sphi 0, %s22
    %s37 = sphi 0, %s23
    %s43 = sphi 0, %s45
    %s46 = sphi 0, %s43
    %s47 = sphi 0, %s46
    %s63 = sphi 0, %s47
    %s67 = sphi 0, %s67
    %s69 = sphi 0, %s67
    %s70 = sphi 0, %s69
    %s84 = sphi 0, %s70
    %s88 = sphi 0, %s88
    %s90 = sphi 0, %s88
    %s91 = sphi 0, %s90
    %s105 = sphi 0, %s91
    %s109 = sphi 0, %s109
    %s111 = sphi 0, %s109
    %s112 = sphi 0, %s111
    %s126 = sphi 0, %s112
    %s130 = sphi 0, %s130
    %s132 = sphi 0, %s130
    %s133 = sphi 0, %s132
    %s147 = sphi 0, %s133
    %s153 = sphi 0, %s155
    %s156 = sphi 0, %s153
    %s157 = sphi 0, %s156
    %s173 = sphi 0, %s157
  $region4: #{basic_block_forward.1} parent=0 // loop_header_branch
    %15 = sbr.rel (%p13) target = $region8
  $region5: #{basic_block_forward.1} parent=0 // loop_body
    %s17 = ssub.s32 %s12, 1
    %s18 = ssub.s32 %s12, 2
    %s19 = sadd.s32 %s12, 1
    %s21 = sadd.s32 %s20, 1
    %p24 = scmp.eq.s32.totalorder %s12, 1
    %p25 = scmp.ne.s32.totalorder %s20, %s22
    %p26 = scmp.eq.s32.totalorder %s12, 0
    %p27 = por %p25, %p26
    %p28 = scmp.ne.s32.totalorder %s20, %s22
    %p29 = scmp.eq.s32.totalorder %s17, 1
    %p30 = por %p28, %p29
    %p31 = scmp.ne.s32.totalorder %s22, %s23
    %p32 = scmp.eq.s32.totalorder %s17, 0
    %p33 = por %p31, %p32
    %p34 = scmp.ne.s32.totalorder %s22, %s23
    %p35 = scmp.eq.s32.totalorder %s18, 1
    %p36 = por %p34, %p35
    %p38 = scmp.ne.s32.totalorder %s23, %s37
    %p39 = scmp.eq.s32.totalorder %s18, 0
    %p40 = por %p38, %p39
    %s41 = ssub.s32 %s12, %s19
    %p42 = scmp.eq.s32.totalorder %s41, 0
    %s44 = sadd.s32 %s43, 1
    %s45 = scalar_select %p42, %s43, %s44
    %p48 = pneg %p42
    %p49 = scmp.eq.s32.totalorder %s12, 1
    %p50 = por %p48, %p49
    %p51 = scmp.ne.s32.totalorder %s43, %s46
    %p52 = scmp.eq.s32.totalorder %s12, 0
    %p53 = por %p51, %p52
    %p54 = scmp.ne.s32.totalorder %s43, %s46
    %p55 = scmp.eq.s32.totalorder %s17, 1
    %p56 = por %p54, %p55
    %p57 = scmp.ne.s32.totalorder %s46, %s47
    %p58 = scmp.eq.s32.totalorder %s17, 0
    %p59 = por %p57, %p58
    %p60 = scmp.ne.s32.totalorder %s46, %s47
    %p61 = scmp.eq.s32.totalorder %s18, 1
    %p62 = por %p60, %p61
    %p64 = scmp.ne.s32.totalorder %s47, %s63
    %p65 = scmp.eq.s32.totalorder %s18, 0
    %p66 = por %p64, %p65
    %s68 = sadd.s32 %s67, 1
    %p71 = scmp.eq.s32.totalorder %s12, 1
    %p72 = scmp.ne.s32.totalorder %s67, %s69
    %p73 = scmp.eq.s32.totalorder %s12, 0
    %p74 = por %p72, %p73
    %p75 = scmp.ne.s32.totalorder %s67, %s69
    %p76 = scmp.eq.s32.totalorder %s17, 1
    %p77 = por %p75, %p76
    %p78 = scmp.ne.s32.totalorder %s69, %s70
    %p79 = scmp.eq.s32.totalorder %s17, 0
    %p80 = por %p78, %p79
    %p81 = scmp.ne.s32.totalorder %s69, %s70
    %p82 = scmp.eq.s32.totalorder %s18, 1
    %p83 = por %p81, %p82
    %p85 = scmp.ne.s32.totalorder %s70, %s84
    %p86 = scmp.eq.s32.totalorder %s18, 0
    %p87 = por %p85, %p86
    %s89 = sadd.s32 %s88, 1
    %p92 = scmp.eq.s32.totalorder %s12, 1
    %p93 = scmp.ne.s32.totalorder %s88, %s90
    %p94 = scmp.eq.s32.totalorder %s12, 0
    %p95 = por %p93, %p94
    %p96 = scmp.ne.s32.totalorder %s88, %s90
    %p97 = scmp.eq.s32.totalorder %s17, 1
    %p98 = por %p96, %p97
    %p99 = scmp.ne.s32.totalorder %s90, %s91
    %p100 = scmp.eq.s32.totalorder %s17, 0
    %p101 = por %p99, %p100
    %p102 = scmp.ne.s32.totalorder %s90, %s91
    %p103 = scmp.eq.s32.totalorder %s18, 1
    %p104 = por %p102, %p103
    %p106 = scmp.ne.s32.totalorder %s91, %s105
    %p107 = scmp.eq.s32.totalorder %s18, 0
    %p108 = por %p106, %p107
    %s110 = sadd.s32 %s109, 1
    %p113 = scmp.eq.s32.totalorder %s12, 1
    %p114 = scmp.ne.s32.totalorder %s109, %s111
    %p115 = scmp.eq.s32.totalorder %s12, 0
    %p116 = por %p114, %p115
    %p117 = scmp.ne.s32.totalorder %s109, %s111
    %p118 = scmp.eq.s32.totalorder %s17, 1
    %p119 = por %p117, %p118
    %p120 = scmp.ne.s32.totalorder %s111, %s112
    %p121 = scmp.eq.s32.totalorder %s17, 0
    %p122 = por %p120, %p121
    %p123 = scmp.ne.s32.totalorder %s111, %s112
    %p124 = scmp.eq.s32.totalorder %s18, 1
    %p125 = por %p123, %p124
    %p127 = scmp.ne.s32.totalorder %s112, %s126
    %p128 = scmp.eq.s32.totalorder %s18, 0
    %p129 = por %p127, %p128
    %s131 = sadd.s32 %s130, 1
    %p134 = scmp.eq.s32.totalorder %s12, 1
    %p135 = scmp.ne.s32.totalorder %s130, %s132
    %p136 = scmp.eq.s32.totalorder %s12, 0
    %p137 = por %p135, %p136
    %p138 = scmp.ne.s32.totalorder %s130, %s132
    %p139 = scmp.eq.s32.totalorder %s17, 1
    %p140 = por %p138, %p139
    %p141 = scmp.ne.s32.totalorder %s132, %s133
    %p142 = scmp.eq.s32.totalorder %s17, 0
    %p143 = por %p141, %p142
    %p144 = scmp.ne.s32.totalorder %s132, %s133
    %p145 = scmp.eq.s32.totalorder %s18, 1
    %p146 = por %p144, %p145
    %p148 = scmp.ne.s32.totalorder %s133, %s147
    %p149 = scmp.eq.s32.totalorder %s18, 0
    %p150 = por %p148, %p149
    %s151 = ssub.s32 %s12, %s19
    %p152 = scmp.eq.s32.totalorder %s151, 0
    %s154 = sadd.s32 %s153, 1
    %s155 = scalar_select %p152, %s153, %s154
    %p158 = pneg %p152
    %p159 = scmp.eq.s32.totalorder %s12, 1
    %p160 = por %p158, %p159
    %p161 = scmp.ne.s32.totalorder %s153, %s156
    %p162 = scmp.eq.s32.totalorder %s12, 0
    %p163 = por %p161, %p162
    %p164 = scmp.ne.s32.totalorder %s153, %s156
    %p165 = scmp.eq.s32.totalorder %s17, 1
    %p166 = por %p164, %p165
    %p167 = scmp.ne.s32.totalorder %s156, %s157
    %p168 = scmp.eq.s32.totalorder %s17, 0
    %p169 = por %p167, %p168
    %p170 = scmp.ne.s32.totalorder %s156, %s157
    %p171 = scmp.eq.s32.totalorder %s18, 1
    %p172 = por %p170, %p171
    %p174 = scmp.ne.s32.totalorder %s157, %s173
    %p175 = scmp.eq.s32.totalorder %s18, 0
    %p176 = por %p174, %p175
    %p177 = scmp.le.s32.totalorder 1, %s12
    %p178 = scmp.lt.s32.totalorder %s12, 3
    %p179 = pnand %p177, %p178
    %p180 = pneg %p179
    // Predicated region
    $region9: #{basic_block_forward.1} parent=5 // pred_check
      _
    $region10: #{basic_block_forward.1} parent=5 // pred_check_branch
      %182 = sbr.rel (%p179) target = $region12
    $region11: #{basic_block_forward.1} parent=5 // pred_region
      %s183 = ssub.s32 %s12, 1
      // Predicated region
      $region13: #{basic_block_forward.1} parent=11 // pred_check
        %p184 = pneg %p33
      $region14: #{basic_block_forward.1} parent=11 // pred_check_branch
        %186 = sbr.rel (%p184) target = $region16
      $region15: #{basic_block_forward.1} parent=11 // pred_region
        _
      $region16: #{basic_block_forward.1} parent=11 // pred_fallthru
        _
      // Predicated region
      $region17: #{basic_block_forward.1} parent=11 // pred_check
        %p187 = pneg %p80
      $region18: #{basic_block_forward.1} parent=11 // pred_check_branch
        %189 = sbr.rel (%p187) target = $region20
      $region19: #{basic_block_forward.1} parent=11 // pred_region
        _
      $region20: #{basic_block_forward.1} parent=11 // pred_fallthru
        _
      // Predicated region
      $region21: #{basic_block_forward.1} parent=11 // pred_check
        %p190 = pneg %p101
      $region22: #{basic_block_forward.1} parent=11 // pred_check_branch
        %192 = sbr.rel (%p190) target = $region24
      $region23: #{basic_block_forward.1} parent=11 // pred_region
        _
      $region24: #{basic_block_forward.1} parent=11 // pred_fallthru
        _
      // Predicated region
      $region25: #{basic_block_forward.1} parent=11 // pred_check
        %p193 = pneg %p122
      $region26: #{basic_block_forward.1} parent=11 // pred_check_branch
        %195 = sbr.rel (%p193) target = $region28
      $region27: #{basic_block_forward.1} parent=11 // pred_region
        _
      $region28: #{basic_block_forward.1} parent=11 // pred_fallthru
        _
      // Predicated region
      $region29: #{basic_block_forward.1} parent=11 // pred_check
        %p196 = pneg %p143
      $region30: #{basic_block_forward.1} parent=11 // pred_check_branch
        %198 = sbr.rel (%p196) target = $region32
      $region31: #{basic_block_forward.1} parent=11 // pred_region
        _
      $region32: #{basic_block_forward.1} parent=11 // pred_fallthru
        _
    $region12: #{basic_block_forward.1} parent=5 // pred_fallthru
      _
    %p199 = scmp.lt.s32.totalorder %s12, 2
    // Predicated region
    $region33: #{basic_block_forward.1} parent=5 // pred_check
      %p200 = pneg %p199
    $region34: #{basic_block_forward.1} parent=5 // pred_check_branch
      %202 = sbr.rel (%p200) target = $region36
    $region35: #{basic_block_forward.1} parent=5 // pred_region
      // Predicated region
      $region37: #{basic_block_forward.1} parent=35 // pred_check
        %p203 = pneg %p53
      $region38: #{basic_block_forward.1} parent=35 // pred_check_branch
        %205 = sbr.rel (%p203) target = $region40
      $region39: #{basic_block_forward.1} parent=35 // pred_region
        %s206 = smul.u32 2, %s12
        %p207 = scmp.lt.s32.totalorder %s206, 3
        %s208 = scalar_select %p207, %s206, 3
        %s209 = smul.addr %s208, 4
        %s210 = scalar_lea.vmem %s1, %s209
        %s211 = smul.u32 2, %s12
      $region40: #{basic_block_forward.1} parent=35 // pred_fallthru
        _
    $region36: #{basic_block_forward.1} parent=5 // pred_fallthru
      _
    %p212 = scmp.le.s32.totalorder 1, %s12
    %p213 = scmp.lt.s32.totalorder %s12, 3
    %p214 = pnand %p212, %p213
    %p215 = pneg %p214
    // Predicated region
    $region41: #{basic_block_forward.1} parent=5 // pred_check
      _
    $region42: #{basic_block_forward.1} parent=5 // pred_check_branch
      %217 = sbr.rel (%p214) target = $region44
    $region43: #{basic_block_forward.1} parent=5 // pred_region
      %s218 = ssub.s32 %s12, 1
      %p219 = pneg %p33
      %p220 = pneg %p30
      %s221 = smul.u32 2, %s17
      %p222 = scmp.lt.s32.totalorder %s221, 3
      %s223 = scalar_select %p222, %s221, 3
      %s224 = smul.addr %s223, 4
      %s225 = scalar_lea.vmem %s1, %s224
      %p226 = pneg %p59
      %p227 = pneg %p56
      %p228 = pneg %p80
      %p229 = pneg %p77
      %p230 = pneg %p101
      %p231 = pneg %p98
      %p232 = pneg %p122
      %p233 = pneg %p119
      %p234 = pneg %p143
      %p235 = pneg %p140
      %p236 = pneg %p169
      %p237 = pneg %p166
      %s238 = smul.u32 2, %s17
      %p239 = scmp.lt.s32.totalorder %s238, 3
      %s240 = scalar_select %p239, %s238, 3
      %s241 = smul.addr %s240, 4
      %s242 = scalar_lea.vmem %s6, %s241
      %s243 = smul.u32 2, %s17
      %p244 = scmp.lt.s32.totalorder %s243, 3
      %s245 = scalar_select %p244, %s243, 3
      %s246 = smul.addr %s245, 4
      %s247 = scalar_lea.vmem %s1, %s246
      %s248 = smul.u32 2, %s17
      %s249 = smul.u32 2, %s17
      %p250 = scmp.lt.s32.totalorder %s249, 3
      %s251 = scalar_select %p250, %s249, 3
      %s252 = smul.addr %s251, 4
      %s253 = scalar_lea.vmem %s6, %s252
      %s254 = smul.u32 2, %s17
      %v256 = vld [vmem:[%s247] sm:$0xff]
      %v257 = vld [vmem:[%s0] sm:$0xff]
      %v258 = vld [vmem:[%s0 + $0x8] sm:$0xff]
      %s259 = scalar_lea.vmem %s2, 8
      %v260 = vld [vmem:[%s259] sm:$0x3]
      %262 = vst [vmem:[#allocation1] ss:$2 sm:$0xff] %v256
      %v263 = vld.sshfl [vmem:[#allocation1] sm:$0xff pattern:$0x75316420]
      %v264 = vld.sshfl [vmem:[#allocation1 + $0x8] sm:$0xff pattern:$0x75316420]
      %v267 = vpack.c.bf16 %v263, %v263
      %v268 = vpack.c.bf16 %v264, %v264
      %269 = vst [vmem:[#allocation1] ss:$2 sm:$0xff] %v256
      %v270 = vld.sshfl [vmem:[#allocation1] sm:$0xff pattern:$0x75316420]
      %v271 = vld.sshfl [vmem:[#allocation1 + $0x8] sm:$0xff pattern:$0x75316420]
      %274 = vrot.lane.b32.xlu0 %v270, 17
      %v275 = vpop.permute.xlu0 %274
      %276 = vrot.lane.b32.xlu0 %v271, 17
      %v277 = vpop.permute.xlu0 %276
      %v278 = vlaneseq
      %v279 = vand.u32 %v278, 127
      %vm280 = vcmp.lt.s32.totalorder %v279, 17
      %v281 = vsel %vm280, %v275, %v277
      %v282 = vsel %vm280, %v277, %v275
      %v283 = vperm.slane %v257, 0
      %v284 = vperm.slane %v258, 0
      %v285 = vmul.f32 %v282, %v283
      %v286 = vmul.f32 %v281, %v284
      %v287 = vld [vmem:[%s2] sm:$0x3]
      %v288 = vpack.c.bf16 %v285, %v285
      %v289 = vpack.c.bf16 %v286, %v286
      %vm290 = vcmask 31744
      %v292 = vsel %vm290, %v287, 0
      %vm294 = vcmask 1041408
      %v296 = vsel %vm294, %v288, 0
      %v299 = vsel %vm294, %v289, 0
      %301 = vmatpush.bf16.msra.mxu0 0
      %302 = vmatpush.bf16.msra.mxu0 0
      %303 = vmatpush.bf16.msra.mxu0 0
      %304 = vmatpush.bf16.msra.mxu0 0
      %305 = vmatpush.bf16.msra.mxu0 0
      %306 = vmatpush.bf16.msra.mxu0 0
      %307 = vmatpush.bf16.msra.mxu0 0
      %308 = vmatpush.bf16.msra.mxu0 %v296
      %309 = vmatmul.bf16.gmra.mxu0 %v292
      %v310 = vpop.f32.mrf.mxu0
      %v311 = vadd.f32 0.0, %v310
      %v312 = vpop.f32.mrf.mxu0
      %313 = vdwg.mxu0
      %314 = vmatpush.bf16.msra.mxu0 0
      %315 = vmatpush.bf16.msra.mxu0 0
      %316 = vmatpush.bf16.msra.mxu0 0
      %317 = vmatpush.bf16.msra.mxu0 0
      %318 = vmatpush.bf16.msra.mxu0 0
      %319 = vmatpush.bf16.msra.mxu0 0
      %320 = vmatpush.bf16.msra.mxu0 0
      %321 = vmatpush.bf16.msra.mxu0 %v299
      %322 = vmatmul.bf16.gmra.mxu0 %v292
      %v323 = vpop.f32.mrf.mxu0
      %v324 = vadd.f32 0.0, %v323
      %v325 = vpop.f32.mrf.mxu0
      %326 = vdwg.mxu0
      %v328 = vsel %vm290, %v260, 0
      %v331 = vsel %vm294, %v267, 0
      %v334 = vsel %vm294, %v268, 0
      %336 = vmatpush.bf16.msra.mxu0 0
      %337 = vmatpush.bf16.msra.mxu0 0
      %338 = vmatpush.bf16.msra.mxu0 0
      %339 = vmatpush.bf16.msra.mxu0 0
      %340 = vmatpush.bf16.msra.mxu0 0
      %341 = vmatpush.bf16.msra.mxu0 0
      %342 = vmatpush.bf16.msra.mxu0 0
      %343 = vmatpush.bf16.msra.mxu0 %v331
      %344 = vmatmul.bf16.gmra.mxu0 %v328
      %v345 = vpop.f32.mrf.mxu0
      %v346 = vadd.f32 %v311, %v345
      %v347 = vpop.f32.mrf.mxu0
      %348 = vdwg.mxu0
      %349 = vmatpush.bf16.msra.mxu0 0
      %350 = vmatpush.bf16.msra.mxu0 0
      %351 = vmatpush.bf16.msra.mxu0 0
      %352 = vmatpush.bf16.msra.mxu0 0
      %353 = vmatpush.bf16.msra.mxu0 0
      %354 = vmatpush.bf16.msra.mxu0 0
      %355 = vmatpush.bf16.msra.mxu0 0
      %356 = vmatpush.bf16.msra.mxu0 %v334
      %357 = vmatmul.bf16.gmra.mxu0 %v328
      %v358 = vpop.f32.mrf.mxu0
      %v359 = vadd.f32 %v324, %v358
      %v360 = vpop.f32.mrf.mxu0
      %361 = vdwg.mxu0
      %362 = vst [vmem:[#allocation1] ss:$2 sm:$0xff] %v256
      %v363 = vld.sshfl [vmem:[#allocation1] sm:$0xff pattern:$0x75316420]
      %v364 = vld.sshfl [vmem:[#allocation1 + $0x8] sm:$0xff pattern:$0x75316420]
      %367 = vrot.lane.b32.xlu0 %v363, 16
      %v368 = vpop.permute.xlu0 %367
      %369 = vrot.lane.b32.xlu0 %v364, 16
      %v370 = vpop.permute.xlu0 %369
      %vm371 = vcmp.lt.s32.totalorder %v279, 16
      %v372 = vsel %vm371, %v368, %v370
      %v373 = vsel %vm371, %v370, %v368
      %v374 = vperm.slane %v257, 1
      %v375 = vperm.slane %v258, 1
      %v376 = vmul.f32 %v373, %v374
      %v377 = vmul.f32 %v372, %v375
      %s378 = scalar_lea.vmem %s2, 2
      %v379 = vld [vmem:[%s378] sm:$0x3]
      %v380 = vpack.c.bf16 %v376, %v376
      %v381 = vpack.c.bf16 %v377, %v377
      %v383 = vsel %vm290, %v379, 0
      %v386 = vsel %vm294, %v380, 0
      %v389 = vsel %vm294, %v381, 0
      %391 = vmatpush.bf16.msra.mxu0 0
      %392 = vmatpush.bf16.msra.mxu0 0
      %393 = vmatpush.bf16.msra.mxu0 0
      %394 = vmatpush.bf16.msra.mxu0 0
      %395 = vmatpush.bf16.msra.mxu0 0
      %396 = vmatpush.bf16.msra.mxu0 0
      %397 = vmatpush.bf16.msra.mxu0 0
      %398 = vmatpush.bf16.msra.mxu0 %v386
      %399 = vmatmul.bf16.gmra.mxu0 %v383
      %v400 = vpop.f32.mrf.mxu0
      %v401 = vadd.f32 0.0, %v400
      %v402 = vpop.f32.mrf.mxu0
      %403 = vdwg.mxu0
      %404 = vmatpush.bf16.msra.mxu0 0
      %405 = vmatpush.bf16.msra.mxu0 0
      %406 = vmatpush.bf16.msra.mxu0 0
      %407 = vmatpush.bf16.msra.mxu0 0
      %408 = vmatpush.bf16.msra.mxu0 0
      %409 = vmatpush.bf16.msra.mxu0 0
      %410 = vmatpush.bf16.msra.mxu0 0
      %411 = vmatpush.bf16.msra.mxu0 %v389
      %412 = vmatmul.bf16.gmra.mxu0 %v383
      %v413 = vpop.f32.mrf.mxu0
      %v414 = vadd.f32 0.0, %v413
      %v415 = vpop.f32.mrf.mxu0
      %416 = vdwg.mxu0
      %v417 = vadd.f32 %v346, %v401
      %v418 = vadd.f32 %v359, %v414
      %419 = vst [vmem:[#allocation1] ss:$2 sm:$0xff] %v256
      %v420 = vld.sshfl [vmem:[#allocation1] sm:$0xff pattern:$0x75316420]
      %v421 = vld.sshfl [vmem:[#allocation1 + $0x8] sm:$0xff pattern:$0x75316420]
      %424 = vrot.lane.b32.xlu0 %v420, 15
      %v425 = vpop.permute.xlu0 %424
      %426 = vrot.lane.b32.xlu0 %v421, 15
      %v427 = vpop.permute.xlu0 %426
      %vm428 = vcmp.lt.s32.totalorder %v279, 15
      %v429 = vsel %vm428, %v425, %v427
      %v430 = vsel %vm428, %v427, %v425
      %v431 = vperm.slane %v257, 2
      %v432 = vperm.slane %v258, 2
      %v433 = vmul.f32 %v430, %v431
      %v434 = vmul.f32 %v429, %v432
      %s435 = scalar_lea.vmem %s2, 4
      %v436 = vld [vmem:[%s435] sm:$0x3]
      %v437 = vpack.c.bf16 %v433, %v433
      %v438 = vpack.c.bf16 %v434, %v434
      %v440 = vsel %vm290, %v436, 0
      %v443 = vsel %vm294, %v437, 0
      %v446 = vsel %vm294, %v438, 0
      %448 = vmatpush.bf16.msra.mxu0 0
      %449 = vmatpush.bf16.msra.mxu0 0
      %450 = vmatpush.bf16.msra.mxu0 0
      %451 = vmatpush.bf16.msra.mxu0 0
      %452 = vmatpush.bf16.msra.mxu0 0
      %453 = vmatpush.bf16.msra.mxu0 0
      %454 = vmatpush.bf16.msra.mxu0 0
      %455 = vmatpush.bf16.msra.mxu0 %v443
      %456 = vmatmul.bf16.gmra.mxu0 %v440
      %v457 = vpop.f32.mrf.mxu0
      %v458 = vadd.f32 0.0, %v457
      %v459 = vpop.f32.mrf.mxu0
      %460 = vdwg.mxu0
      %461 = vmatpush.bf16.msra.mxu0 0
      %462 = vmatpush.bf16.msra.mxu0 0
      %463 = vmatpush.bf16.msra.mxu0 0
      %464 = vmatpush.bf16.msra.mxu0 0
      %465 = vmatpush.bf16.msra.mxu0 0
      %466 = vmatpush.bf16.msra.mxu0 0
      %467 = vmatpush.bf16.msra.mxu0 0
      %468 = vmatpush.bf16.msra.mxu0 %v446
      %469 = vmatmul.bf16.gmra.mxu0 %v440
      %v470 = vpop.f32.mrf.mxu0
      %v471 = vadd.f32 0.0, %v470
      %v472 = vpop.f32.mrf.mxu0
      %473 = vdwg.mxu0
      %v474 = vadd.f32 %v417, %v458
      %v475 = vadd.f32 %v418, %v471
      %476 = vst [vmem:[#allocation1] ss:$2 sm:$0xff] %v256
      %v477 = vld.sshfl [vmem:[#allocation1] sm:$0xff pattern:$0x75316420]
      %v478 = vld.sshfl [vmem:[#allocation1 + $0x8] sm:$0xff pattern:$0x75316420]
      %481 = vrot.lane.b32.xlu0 %v477, 1
      %v482 = vpop.permute.xlu0 %481
      %483 = vrot.lane.b32.xlu0 %v478, 1
      %v484 = vpop.permute.xlu0 %483
      %vm485 = vcmp.lt.s32.totalorder %v279, 1
      %v486 = vsel %vm485, %v482, %v484
      %v487 = vsel %vm485, %v484, %v482
      %v488 = vperm.slane %v257, 3
      %v489 = vperm.slane %v258, 3
      %v490 = vmul.f32 %v487, %v488
      %v491 = vmul.f32 %v486, %v489
      %s492 = scalar_lea.vmem %s2, 6
      %v493 = vld [vmem:[%s492] sm:$0x3]
      %v494 = vpack.c.bf16 %v490, %v490
      %v495 = vpack.c.bf16 %v491, %v491
      %v497 = vsel %vm290, %v493, 0
      %v500 = vsel %vm294, %v494, 0
      %v503 = vsel %vm294, %v495, 0
      %505 = vmatpush.bf16.msra.mxu0 0
      %506 = vmatpush.bf16.msra.mxu0 0
      %507 = vmatpush.bf16.msra.mxu0 0
      %508 = vmatpush.bf16.msra.mxu0 0
      %509 = vmatpush.bf16.msra.mxu0 0
      %510 = vmatpush.bf16.msra.mxu0 0
      %511 = vmatpush.bf16.msra.mxu0 0
      %512 = vmatpush.bf16.msra.mxu0 %v500
      %513 = vmatmul.bf16.gmra.mxu0 %v497
      %v514 = vpop.f32.mrf.mxu0
      %v515 = vadd.f32 0.0, %v514
      %v516 = vpop.f32.mrf.mxu0
      %517 = vdwg.mxu0
      %518 = vmatpush.bf16.msra.mxu0 0
      %519 = vmatpush.bf16.msra.mxu0 0
      %520 = vmatpush.bf16.msra.mxu0 0
      %521 = vmatpush.bf16.msra.mxu0 0
      %522 = vmatpush.bf16.msra.mxu0 0
      %523 = vmatpush.bf16.msra.mxu0 0
      %524 = vmatpush.bf16.msra.mxu0 0
      %525 = vmatpush.bf16.msra.mxu0 %v503
      %526 = vmatmul.bf16.gmra.mxu0 %v497
      %v527 = vpop.f32.mrf.mxu0
      %v528 = vadd.f32 0.0, %v527
      %v529 = vpop.f32.mrf.mxu0
      %530 = vdwg.mxu0
      %v531 = vadd.f32 %v474, %v515
      %v532 = vadd.f32 %v475, %v528
      %533 = vst [vmem:[#allocation1] ss:$2 sm:$0xff] %v256
      %v534 = vld.sshfl [vmem:[#allocation1] sm:$0xff pattern:$0x75316420]
      %v535 = vld.sshfl [vmem:[#allocation1 + $0x8] sm:$0xff pattern:$0x75316420]
      %538 = vrot.lane.b32.xlu0 %v534, 127
      %v539 = vpop.permute.xlu0 %538
      %540 = vrot.lane.b32.xlu0 %v535, 127
      %v541 = vpop.permute.xlu0 %540
      %vm542 = vcmp.lt.s32.totalorder %v279, 127
      %v543 = vsel %vm542, %v539, %v541
      %v544 = vsel %vm542, %v541, %v539
      %v545 = vperm.slane %v257, 4
      %v546 = vperm.slane %v258, 4
      %v547 = vmul.f32 %v543, %v545
      %v548 = vmul.f32 %v544, %v546
      %s549 = scalar_lea.vmem %s2, 10
      %v550 = vld [vmem:[%s549] sm:$0x3]
      %v551 = vpack.c.bf16 %v547, %v547
      %v552 = vpack.c.bf16 %v548, %v548
      %v554 = vsel %vm290, %v550, 0
      %v557 = vsel %vm294, %v551, 0
      %v560 = vsel %vm294, %v552, 0
      %562 = vmatpush.bf16.msra.mxu0 0
      %563 = vmatpush.bf16.msra.mxu0 0
      %564 = vmatpush.bf16.msra.mxu0 0
      %565 = vmatpush.bf16.msra.mxu0 0
      %566 = vmatpush.bf16.msra.mxu0 0
      %567 = vmatpush.bf16.msra.mxu0 0
      %568 = vmatpush.bf16.msra.mxu0 0
      %569 = vmatpush.bf16.msra.mxu0 %v557
      %570 = vmatmul.bf16.gmra.mxu0 %v554
      %v571 = vpop.f32.mrf.mxu0
      %v572 = vadd.f32 0.0, %v571
      %v573 = vpop.f32.mrf.mxu0
      %574 = vdwg.mxu0
      %575 = vmatpush.bf16.msra.mxu0 0
      %576 = vmatpush.bf16.msra.mxu0 0
      %577 = vmatpush.bf16.msra.mxu0 0
      %578 = vmatpush.bf16.msra.mxu0 0
      %579 = vmatpush.bf16.msra.mxu0 0
      %580 = vmatpush.bf16.msra.mxu0 0
      %581 = vmatpush.bf16.msra.mxu0 0
      %582 = vmatpush.bf16.msra.mxu0 %v560
      %583 = vmatmul.bf16.gmra.mxu0 %v554
      %v584 = vpop.f32.mrf.mxu0
      %v585 = vadd.f32 0.0, %v584
      %v586 = vpop.f32.mrf.mxu0
      %587 = vdwg.mxu0
      %v588 = vadd.f32 %v531, %v572
      %v589 = vadd.f32 %v532, %v585
      %590 = vst [vmem:[#allocation1] ss:$2 sm:$0xff] %v256
      %v591 = vld.sshfl [vmem:[#allocation1] sm:$0xff pattern:$0x75316420]
      %v592 = vld.sshfl [vmem:[#allocation1 + $0x8] sm:$0xff pattern:$0x75316420]
      %595 = vrot.lane.b32.xlu0 %v591, 113
      %v596 = vpop.permute.xlu0 %595
      %597 = vrot.lane.b32.xlu0 %v592, 113
      %v598 = vpop.permute.xlu0 %597
      %vm599 = vcmp.lt.s32.totalorder %v279, 113
      %v600 = vsel %vm599, %v596, %v598
      %v601 = vsel %vm599, %v598, %v596
      %v602 = vperm.slane %v257, 5
      %v603 = vperm.slane %v258, 5
      %v604 = vmul.f32 %v600, %v602
      %v605 = vmul.f32 %v601, %v603
      %s606 = scalar_lea.vmem %s2, 12
      %v607 = vld [vmem:[%s606] sm:$0x3]
      %v608 = vpack.c.bf16 %v604, %v604
      %v609 = vpack.c.bf16 %v605, %v605
      %v611 = vsel %vm290, %v607, 0
      %v614 = vsel %vm294, %v608, 0
      %v617 = vsel %vm294, %v609, 0
      %619 = vmatpush.bf16.msra.mxu0 0
      %620 = vmatpush.bf16.msra.mxu0 0
      %621 = vmatpush.bf16.msra.mxu0 0
      %622 = vmatpush.bf16.msra.mxu0 0
      %623 = vmatpush.bf16.msra.mxu0 0
      %624 = vmatpush.bf16.msra.mxu0 0
      %625 = vmatpush.bf16.msra.mxu0 0
      %626 = vmatpush.bf16.msra.mxu0 %v614
      %627 = vmatmul.bf16.gmra.mxu0 %v611
      %v628 = vpop.f32.mrf.mxu0
      %v629 = vadd.f32 0.0, %v628
      %v630 = vpop.f32.mrf.mxu0
      %631 = vdwg.mxu0
      %632 = vmatpush.bf16.msra.mxu0 0
      %633 = vmatpush.bf16.msra.mxu0 0
      %634 = vmatpush.bf16.msra.mxu0 0
      %635 = vmatpush.bf16.msra.mxu0 0
      %636 = vmatpush.bf16.msra.mxu0 0
      %637 = vmatpush.bf16.msra.mxu0 0
      %638 = vmatpush.bf16.msra.mxu0 0
      %639 = vmatpush.bf16.msra.mxu0 %v617
      %640 = vmatmul.bf16.gmra.mxu0 %v611
      %v641 = vpop.f32.mrf.mxu0
      %v642 = vadd.f32 0.0, %v641
      %v643 = vpop.f32.mrf.mxu0
      %644 = vdwg.mxu0
      %v645 = vadd.f32 %v588, %v629
      %v646 = vadd.f32 %v589, %v642
      %647 = vst [vmem:[#allocation1] ss:$2 sm:$0xff] %v256
      %v648 = vld.sshfl [vmem:[#allocation1] sm:$0xff pattern:$0x75316420]
      %v649 = vld.sshfl [vmem:[#allocation1 + $0x8] sm:$0xff pattern:$0x75316420]
      %652 = vrot.lane.b32.xlu0 %v648, 112
      %v653 = vpop.permute.xlu0 %652
      %654 = vrot.lane.b32.xlu0 %v649, 112
      %v655 = vpop.permute.xlu0 %654
      %vm656 = vcmp.lt.s32.totalorder %v279, 112
      %v657 = vsel %vm656, %v653, %v655
      %v658 = vsel %vm656, %v655, %v653
      %v659 = vperm.slane %v257, 6
      %v660 = vperm.slane %v258, 6
      %v661 = vmul.f32 %v657, %v659
      %v662 = vmul.f32 %v658, %v660
      %s663 = scalar_lea.vmem %s2, 14
      %v664 = vld [vmem:[%s663] sm:$0x3]
      %v665 = vpack.c.bf16 %v661, %v661
      %v666 = vpack.c.bf16 %v662, %v662
      %v668 = vsel %vm290, %v664, 0
      %v671 = vsel %vm294, %v665, 0
      %v674 = vsel %vm294, %v666, 0
      %676 = vmatpush.bf16.msra.mxu0 0
      %677 = vmatpush.bf16.msra.mxu0 0
      %678 = vmatpush.bf16.msra.mxu0 0
      %679 = vmatpush.bf16.msra.mxu0 0
      %680 = vmatpush.bf16.msra.mxu0 0
      %681 = vmatpush.bf16.msra.mxu0 0
      %682 = vmatpush.bf16.msra.mxu0 0
      %683 = vmatpush.bf16.msra.mxu0 %v671
      %684 = vmatmul.bf16.gmra.mxu0 %v668
      %v685 = vpop.f32.mrf.mxu0
      %v686 = vadd.f32 0.0, %v685
      %v687 = vpop.f32.mrf.mxu0
      %688 = vdwg.mxu0
      %689 = vmatpush.bf16.msra.mxu0 0
      %690 = vmatpush.bf16.msra.mxu0 0
      %691 = vmatpush.bf16.msra.mxu0 0
      %692 = vmatpush.bf16.msra.mxu0 0
      %693 = vmatpush.bf16.msra.mxu0 0
      %694 = vmatpush.bf16.msra.mxu0 0
      %695 = vmatpush.bf16.msra.mxu0 0
      %696 = vmatpush.bf16.msra.mxu0 %v674
      %697 = vmatmul.bf16.gmra.mxu0 %v668
      %v698 = vpop.f32.mrf.mxu0
      %v699 = vadd.f32 0.0, %v698
      %v700 = vpop.f32.mrf.mxu0
      %701 = vdwg.mxu0
      %v702 = vadd.f32 %v645, %v686
      %v703 = vadd.f32 %v646, %v699
      %704 = vst [vmem:[#allocation1] ss:$2 sm:$0xff] %v256
      %v705 = vld.sshfl [vmem:[#allocation1] sm:$0xff pattern:$0x75316420]
      %v706 = vld.sshfl [vmem:[#allocation1 + $0x8] sm:$0xff pattern:$0x75316420]
      %709 = vrot.lane.b32.xlu0 %v705, 111
      %v710 = vpop.permute.xlu0 %709
      %711 = vrot.lane.b32.xlu0 %v706, 111
      %v712 = vpop.permute.xlu0 %711
      %vm713 = vcmp.lt.s32.totalorder %v279, 111
      %v714 = vsel %vm713, %v710, %v712
      %v715 = vsel %vm713, %v712, %v710
      %v716 = vperm.slane %v257, 7
      %v717 = vperm.slane %v258, 7
      %v718 = vmul.f32 %v714, %v716
      %v719 = vmul.f32 %v715, %v717
      %s720 = scalar_lea.vmem %s2, 16
      %v721 = vld [vmem:[%s720] sm:$0x3]
      %v722 = vpack.c.bf16 %v718, %v718
      %v723 = vpack.c.bf16 %v719, %v719
      %v725 = vsel %vm290, %v721, 0
      %v728 = vsel %vm294, %v722, 0
      %v731 = vsel %vm294, %v723, 0
      %733 = vmatpush.bf16.msra.mxu0 0
      %734 = vmatpush.bf16.msra.mxu0 0
      %735 = vmatpush.bf16.msra.mxu0 0
      %736 = vmatpush.bf16.msra.mxu0 0
      %737 = vmatpush.bf16.msra.mxu0 0
      %738 = vmatpush.bf16.msra.mxu0 0
      %739 = vmatpush.bf16.msra.mxu0 0
      %740 = vmatpush.bf16.msra.mxu0 %v728
      %741 = vmatmul.bf16.gmra.mxu0 %v725
      %v742 = vpop.f32.mrf.mxu0
      %v743 = vadd.f32 0.0, %v742
      %v744 = vpop.f32.mrf.mxu0
      %745 = vdwg.mxu0
      %746 = vmatpush.bf16.msra.mxu0 0
      %747 = vmatpush.bf16.msra.mxu0 0
      %748 = vmatpush.bf16.msra.mxu0 0
      %749 = vmatpush.bf16.msra.mxu0 0
      %750 = vmatpush.bf16.msra.mxu0 0
      %751 = vmatpush.bf16.msra.mxu0 0
      %752 = vmatpush.bf16.msra.mxu0 0
      %753 = vmatpush.bf16.msra.mxu0 %v731
      %754 = vmatmul.bf16.gmra.mxu0 %v725
      %v755 = vpop.f32.mrf.mxu0
      %v756 = vadd.f32 0.0, %v755
      %v757 = vpop.f32.mrf.mxu0
      %758 = vdwg.mxu0
      %v759 = vadd.f32 %v702, %v743
      %v760 = vadd.f32 %v703, %v756
      %v761 = vld [vmem:[%s3] sm:$0xf]
      %763 = vset.pattern.permute.xlu0 0
      %764 = vperm.xlu0 %763, %v761
      %v765 = vpop.permute.xlu0 %764
      %v767 = vadd.f32 %v759, %v765
      %v768 = vadd.f32 %v760, %v765
      %v769 = vmax.f32 %v767, 0.0
      %v770 = vmax.f32 %v768, 0.0
      %s771 = scalar_lea.vmem %s4, 8
      %v772 = vld [vmem:[%s771] sm:$0x3]
      %v773 = vpack.c.bf16 %v769, %v769
      %v774 = vpack.c.bf16 %v770, %v770
      %775 = vrot.lane.b32.xlu0 %v769, 17
      %v776 = vpop.permute.xlu0 %775
      %777 = vrot.lane.b32.xlu0 %v770, 17
      %v778 = vpop.permute.xlu0 %777
      %v779 = vsel %vm280, %v776, %v778
      %v780 = vsel %vm280, %v778, %v776
      %v781 = vmul.f32 %v780, %v283
      %v782 = vmul.f32 %v779, %v284
      %v783 = vld [vmem:[%s4] sm:$0x3]
      %v784 = vpack.c.bf16 %v781, %v781
      %v785 = vpack.c.bf16 %v782, %v782
      %v787 = vsel %vm290, %v783, 0
      %v790 = vsel %vm294, %v784, 0
      %v793 = vsel %vm294, %v785, 0
      %795 = vmatpush.bf16.msra.mxu0 0
      %796 = vmatpush.bf16.msra.mxu0 0
      %797 = vmatpush.bf16.msra.mxu0 0
      %798 = vmatpush.bf16.msra.mxu0 0
      %799 = vmatpush.bf16.msra.mxu0 0
      %800 = vmatpush.bf16.msra.mxu0 0
      %801 = vmatpush.bf16.msra.mxu0 0
      %802 = vmatpush.bf16.msra.mxu0 %v790
      %803 = vmatmul.bf16.gmra.mxu0 %v787
      %v804 = vpop.f32.mrf.mxu0
      %v805 = vadd.f32 0.0, %v804
      %v806 = vpop.f32.mrf.mxu0
      %807 = vdwg.mxu0
      %808 = vmatpush.bf16.msra.mxu0 0
      %809 = vmatpush.bf16.msra.mxu0 0
      %810 = vmatpush.bf16.msra.mxu0 0
      %811 = vmatpush.bf16.msra.mxu0 0
      %812 = vmatpush.bf16.msra.mxu0 0
      %813 = vmatpush.bf16.msra.mxu0 0
      %814 = vmatpush.bf16.msra.mxu0 0
      %815 = vmatpush.bf16.msra.mxu0 %v793
      %816 = vmatmul.bf16.gmra.mxu0 %v787
      %v817 = vpop.f32.mrf.mxu0
      %v818 = vadd.f32 0.0, %v817
      %v819 = vpop.f32.mrf.mxu0
      %820 = vdwg.mxu0
      %v822 = vsel %vm290, %v772, 0
      %v825 = vsel %vm294, %v773, 0
      %v828 = vsel %vm294, %v774, 0
      %830 = vmatpush.bf16.msra.mxu0 0
      %831 = vmatpush.bf16.msra.mxu0 0
      %832 = vmatpush.bf16.msra.mxu0 0
      %833 = vmatpush.bf16.msra.mxu0 0
      %834 = vmatpush.bf16.msra.mxu0 0
      %835 = vmatpush.bf16.msra.mxu0 0
      %836 = vmatpush.bf16.msra.mxu0 0
      %837 = vmatpush.bf16.msra.mxu0 %v825
      %838 = vmatmul.bf16.gmra.mxu0 %v822
      %v839 = vpop.f32.mrf.mxu0
      %v840 = vadd.f32 %v805, %v839
      %v841 = vpop.f32.mrf.mxu0
      %842 = vdwg.mxu0
      %843 = vmatpush.bf16.msra.mxu0 0
      %844 = vmatpush.bf16.msra.mxu0 0
      %845 = vmatpush.bf16.msra.mxu0 0
      %846 = vmatpush.bf16.msra.mxu0 0
      %847 = vmatpush.bf16.msra.mxu0 0
      %848 = vmatpush.bf16.msra.mxu0 0
      %849 = vmatpush.bf16.msra.mxu0 0
      %850 = vmatpush.bf16.msra.mxu0 %v828
      %851 = vmatmul.bf16.gmra.mxu0 %v822
      %v852 = vpop.f32.mrf.mxu0
      %v853 = vadd.f32 %v818, %v852
      %v854 = vpop.f32.mrf.mxu0
      %855 = vdwg.mxu0
      %856 = vrot.lane.b32.xlu0 %v769, 16
      %v857 = vpop.permute.xlu0 %856
      %858 = vrot.lane.b32.xlu0 %v770, 16
      %v859 = vpop.permute.xlu0 %858
      %v860 = vsel %vm371, %v857, %v859
      %v861 = vsel %vm371, %v859, %v857
      %v862 = vmul.f32 %v861, %v374
      %v863 = vmul.f32 %v860, %v375
      %s864 = scalar_lea.vmem %s4, 2
      %v865 = vld [vmem:[%s864] sm:$0x3]
      %v866 = vpack.c.bf16 %v862, %v862
      %v867 = vpack.c.bf16 %v863, %v863
      %v869 = vsel %vm290, %v865, 0
      %v872 = vsel %vm294, %v866, 0
      %v875 = vsel %vm294, %v867, 0
      %877 = vmatpush.bf16.msra.mxu0 0
      %878 = vmatpush.bf16.msra.mxu0 0
      %879 = vmatpush.bf16.msra.mxu0 0
      %880 = vmatpush.bf16.msra.mxu0 0
      %881 = vmatpush.bf16.msra.mxu0 0
      %882 = vmatpush.bf16.msra.mxu0 0
      %883 = vmatpush.bf16.msra.mxu0 0
      %884 = vmatpush.bf16.msra.mxu0 %v872
      %885 = vmatmul.bf16.gmra.mxu0 %v869
      %v886 = vpop.f32.mrf.mxu0
      %v887 = vadd.f32 0.0, %v886
      %v888 = vpop.f32.mrf.mxu0
      %889 = vdwg.mxu0
      %890 = vmatpush.bf16.msra.mxu0 0
      %891 = vmatpush.bf16.msra.mxu0 0
      %892 = vmatpush.bf16.msra.mxu0 0
      %893 = vmatpush.bf16.msra.mxu0 0
      %894 = vmatpush.bf16.msra.mxu0 0
      %895 = vmatpush.bf16.msra.mxu0 0
      %896 = vmatpush.bf16.msra.mxu0 0
      %897 = vmatpush.bf16.msra.mxu0 %v875
      %898 = vmatmul.bf16.gmra.mxu0 %v869
      %v899 = vpop.f32.mrf.mxu0
      %v900 = vadd.f32 0.0, %v899
      %v901 = vpop.f32.mrf.mxu0
      %902 = vdwg.mxu0
      %v903 = vadd.f32 %v840, %v887
      %v904 = vadd.f32 %v853, %v900
      %905 = vrot.lane.b32.xlu0 %v769, 15
      %v906 = vpop.permute.xlu0 %905
      %907 = vrot.lane.b32.xlu0 %v770, 15
      %v908 = vpop.permute.xlu0 %907
      %v909 = vsel %vm428, %v906, %v908
      %v910 = vsel %vm428, %v908, %v906
      %v911 = vmul.f32 %v910, %v431
      %v912 = vmul.f32 %v909, %v432
      %s913 = scalar_lea.vmem %s4, 4
      %v914 = vld [vmem:[%s913] sm:$0x3]
      %v915 = vpack.c.bf16 %v911, %v911
      %v916 = vpack.c.bf16 %v912, %v912
      %v918 = vsel %vm290, %v914, 0
      %v921 = vsel %vm294, %v915, 0
      %v924 = vsel %vm294, %v916, 0
      %926 = vmatpush.bf16.msra.mxu0 0
      %927 = vmatpush.bf16.msra.mxu0 0
      %928 = vmatpush.bf16.msra.mxu0 0
      %929 = vmatpush.bf16.msra.mxu0 0
      %930 = vmatpush.bf16.msra.mxu0 0
      %931 = vmatpush.bf16.msra.mxu0 0
      %932 = vmatpush.bf16.msra.mxu0 0
      %933 = vmatpush.bf16.msra.mxu0 %v921
      %934 = vmatmul.bf16.gmra.mxu0 %v918
      %v935 = vpop.f32.mrf.mxu0
      %v936 = vadd.f32 0.0, %v935
      %v937 = vpop.f32.mrf.mxu0
      %938 = vdwg.mxu0
      %939 = vmatpush.bf16.msra.mxu0 0
      %940 = vmatpush.bf16.msra.mxu0 0
      %941 = vmatpush.bf16.msra.mxu0 0
      %942 = vmatpush.bf16.msra.mxu0 0
      %943 = vmatpush.bf16.msra.mxu0 0
      %944 = vmatpush.bf16.msra.mxu0 0
      %945 = vmatpush.bf16.msra.mxu0 0
      %946 = vmatpush.bf16.msra.mxu0 %v924
      %947 = vmatmul.bf16.gmra.mxu0 %v918
      %v948 = vpop.f32.mrf.mxu0
      %v949 = vadd.f32 0.0, %v948
      %v950 = vpop.f32.mrf.mxu0
      %951 = vdwg.mxu0
      %v952 = vadd.f32 %v903, %v936
      %v953 = vadd.f32 %v904, %v949
      %954 = vrot.lane.b32.xlu0 %v769, 1
      %v955 = vpop.permute.xlu0 %954
      %956 = vrot.lane.b32.xlu0 %v770, 1
      %v957 = vpop.permute.xlu0 %956
      %v958 = vsel %vm485, %v955, %v957
      %v959 = vsel %vm485, %v957, %v955
      %v960 = vmul.f32 %v959, %v488
      %v961 = vmul.f32 %v958, %v489
      %s962 = scalar_lea.vmem %s4, 6
      %v963 = vld [vmem:[%s962] sm:$0x3]
      %v964 = vpack.c.bf16 %v960, %v960
      %v965 = vpack.c.bf16 %v961, %v961
      %v967 = vsel %vm290, %v963, 0
      %v970 = vsel %vm294, %v964, 0
      %v973 = vsel %vm294, %v965, 0
      %975 = vmatpush.bf16.msra.mxu0 0
      %976 = vmatpush.bf16.msra.mxu0 0
      %977 = vmatpush.bf16.msra.mxu0 0
      %978 = vmatpush.bf16.msra.mxu0 0
      %979 = vmatpush.bf16.msra.mxu0 0
      %980 = vmatpush.bf16.msra.mxu0 0
      %981 = vmatpush.bf16.msra.mxu0 0
      %982 = vmatpush.bf16.msra.mxu0 %v970
      %983 = vmatmul.bf16.gmra.mxu0 %v967
      %v984 = vpop.f32.mrf.mxu0
      %v985 = vadd.f32 0.0, %v984
      %v986 = vpop.f32.mrf.mxu0
      %987 = vdwg.mxu0
      %988 = vmatpush.bf16.msra.mxu0 0
      %989 = vmatpush.bf16.msra.mxu0 0
      %990 = vmatpush.bf16.msra.mxu0 0
      %991 = vmatpush.bf16.msra.mxu0 0
      %992 = vmatpush.bf16.msra.mxu0 0
      %993 = vmatpush.bf16.msra.mxu0 0
      %994 = vmatpush.bf16.msra.mxu0 0
      %995 = vmatpush.bf16.msra.mxu0 %v973
      %996 = vmatmul.bf16.gmra.mxu0 %v967
      %v997 = vpop.f32.mrf.mxu0
      %v998 = vadd.f32 0.0, %v997
      %v999 = vpop.f32.mrf.mxu0
      %1000 = vdwg.mxu0
      %v1001 = vadd.f32 %v952, %v985
      %v1002 = vadd.f32 %v953, %v998
      %1003 = vrot.lane.b32.xlu0 %v769, 127
      %v1004 = vpop.permute.xlu0 %1003
      %1005 = vrot.lane.b32.xlu0 %v770, 127
      %v1006 = vpop.permute.xlu0 %1005
      %v1007 = vsel %vm542, %v1004, %v1006
      %v1008 = vsel %vm542, %v1006, %v1004
      %v1009 = vmul.f32 %v1007, %v545
      %v1010 = vmul.f32 %v1008, %v546
      %s1011 = scalar_lea.vmem %s4, 10
      %v1012 = vld [vmem:[%s1011] sm:$0x3]
      %v1013 = vpack.c.bf16 %v1009, %v1009
      %v1014 = vpack.c.bf16 %v1010, %v1010
      %v1016 = vsel %vm290, %v1012, 0
      %v1019 = vsel %vm294, %v1013, 0
      %v1022 = vsel %vm294, %v1014, 0
      %1024 = vmatpush.bf16.msra.mxu0 0
      %1025 = vmatpush.bf16.msra.mxu0 0
      %1026 = vmatpush.bf16.msra.mxu0 0
      %1027 = vmatpush.bf16.msra.mxu0 0
      %1028 = vmatpush.bf16.msra.mxu0 0
      %1029 = vmatpush.bf16.msra.mxu0 0
      %1030 = vmatpush.bf16.msra.mxu0 0
      %1031 = vmatpush.bf16.msra.mxu0 %v1019
      %1032 = vmatmul.bf16.gmra.mxu0 %v1016
      %v1033 = vpop.f32.mrf.mxu0
      %v1034 = vadd.f32 0.0, %v1033
      %v1035 = vpop.f32.mrf.mxu0
      %1036 = vdwg.mxu0
      %1037 = vmatpush.bf16.msra.mxu0 0
      %1038 = vmatpush.bf16.msra.mxu0 0
      %1039 = vmatpush.bf16.msra.mxu0 0
      %1040 = vmatpush.bf16.msra.mxu0 0
      %1041 = vmatpush.bf16.msra.mxu0 0
      %1042 = vmatpush.bf16.msra.mxu0 0
      %1043 = vmatpush.bf16.msra.mxu0 0
      %1044 = vmatpush.bf16.msra.mxu0 %v1022
      %1045 = vmatmul.bf16.gmra.mxu0 %v1016
      %v1046 = vpop.f32.mrf.mxu0
      %v1047 = vadd.f32 0.0, %v1046
      %v1048 = vpop.f32.mrf.mxu0
      %1049 = vdwg.mxu0
      %v1050 = vadd.f32 %v1001, %v1034
      %v1051 = vadd.f32 %v1002, %v1047
      %1052 = vrot.lane.b32.xlu0 %v769, 113
      %v1053 = vpop.permute.xlu0 %1052
      %1054 = vrot.lane.b32.xlu0 %v770, 113
      %v1055 = vpop.permute.xlu0 %1054
      %v1056 = vsel %vm599, %v1053, %v1055
      %v1057 = vsel %vm599, %v1055, %v1053
      %v1058 = vmul.f32 %v1056, %v602
      %v1059 = vmul.f32 %v1057, %v603
      %s1060 = scalar_lea.vmem %s4, 12
      %v1061 = vld [vmem:[%s1060] sm:$0x3]
      %v1062 = vpack.c.bf16 %v1058, %v1058
      %v1063 = vpack.c.bf16 %v1059, %v1059
      %v1065 = vsel %vm290, %v1061, 0
      %v1068 = vsel %vm294, %v1062, 0
      %v1071 = vsel %vm294, %v1063, 0
      %1073 = vmatpush.bf16.msra.mxu0 0
      %1074 = vmatpush.bf16.msra.mxu0 0
      %1075 = vmatpush.bf16.msra.mxu0 0
      %1076 = vmatpush.bf16.msra.mxu0 0
      %1077 = vmatpush.bf16.msra.mxu0 0
      %1078 = vmatpush.bf16.msra.mxu0 0
      %1079 = vmatpush.bf16.msra.mxu0 0
      %1080 = vmatpush.bf16.msra.mxu0 %v1068
      %1081 = vmatmul.bf16.gmra.mxu0 %v1065
      %v1082 = vpop.f32.mrf.mxu0
      %v1083 = vadd.f32 0.0, %v1082
      %v1084 = vpop.f32.mrf.mxu0
      %1085 = vdwg.mxu0
      %1086 = vmatpush.bf16.msra.mxu0 0
      %1087 = vmatpush.bf16.msra.mxu0 0
      %1088 = vmatpush.bf16.msra.mxu0 0
      %1089 = vmatpush.bf16.msra.mxu0 0
      %1090 = vmatpush.bf16.msra.mxu0 0
      %1091 = vmatpush.bf16.msra.mxu0 0
      %1092 = vmatpush.bf16.msra.mxu0 0
      %1093 = vmatpush.bf16.msra.mxu0 %v1071
      %1094 = vmatmul.bf16.gmra.mxu0 %v1065
      %v1095 = vpop.f32.mrf.mxu0
      %v1096 = vadd.f32 0.0, %v1095
      %v1097 = vpop.f32.mrf.mxu0
      %1098 = vdwg.mxu0
      %v1099 = vadd.f32 %v1050, %v1083
      %v1100 = vadd.f32 %v1051, %v1096
      %1101 = vrot.lane.b32.xlu0 %v769, 112
      %v1102 = vpop.permute.xlu0 %1101
      %1103 = vrot.lane.b32.xlu0 %v770, 112
      %v1104 = vpop.permute.xlu0 %1103
      %v1105 = vsel %vm656, %v1102, %v1104
      %v1106 = vsel %vm656, %v1104, %v1102
      %v1107 = vmul.f32 %v1105, %v659
      %v1108 = vmul.f32 %v1106, %v660
      %s1109 = scalar_lea.vmem %s4, 14
      %v1110 = vld [vmem:[%s1109] sm:$0x3]
      %v1111 = vpack.c.bf16 %v1107, %v1107
      %v1112 = vpack.c.bf16 %v1108, %v1108
      %v1114 = vsel %vm290, %v1110, 0
      %v1117 = vsel %vm294, %v1111, 0
      %v1120 = vsel %vm294, %v1112, 0
      %1122 = vmatpush.bf16.msra.mxu0 0
      %1123 = vmatpush.bf16.msra.mxu0 0
      %1124 = vmatpush.bf16.msra.mxu0 0
      %1125 = vmatpush.bf16.msra.mxu0 0
      %1126 = vmatpush.bf16.msra.mxu0 0
      %1127 = vmatpush.bf16.msra.mxu0 0
      %1128 = vmatpush.bf16.msra.mxu0 0
      %1129 = vmatpush.bf16.msra.mxu0 %v1117
      %1130 = vmatmul.bf16.gmra.mxu0 %v1114
      %v1131 = vpop.f32.mrf.mxu0
      %v1132 = vadd.f32 0.0, %v1131
      %v1133 = vpop.f32.mrf.mxu0
      %1134 = vdwg.mxu0
      %1135 = vmatpush.bf16.msra.mxu0 0
      %1136 = vmatpush.bf16.msra.mxu0 0
      %1137 = vmatpush.bf16.msra.mxu0 0
      %1138 = vmatpush.bf16.msra.mxu0 0
      %1139 = vmatpush.bf16.msra.mxu0 0
      %1140 = vmatpush.bf16.msra.mxu0 0
      %1141 = vmatpush.bf16.msra.mxu0 0
      %1142 = vmatpush.bf16.msra.mxu0 %v1120
      %1143 = vmatmul.bf16.gmra.mxu0 %v1114
      %v1144 = vpop.f32.mrf.mxu0
      %v1145 = vadd.f32 0.0, %v1144
      %v1146 = vpop.f32.mrf.mxu0
      %1147 = vdwg.mxu0
      %v1148 = vadd.f32 %v1099, %v1132
      %v1149 = vadd.f32 %v1100, %v1145
      %1150 = vrot.lane.b32.xlu0 %v769, 111
      %v1151 = vpop.permute.xlu0 %1150
      %1152 = vrot.lane.b32.xlu0 %v770, 111
      %v1153 = vpop.permute.xlu0 %1152
      %v1154 = vsel %vm713, %v1151, %v1153
      %v1155 = vsel %vm713, %v1153, %v1151
      %v1156 = vmul.f32 %v1154, %v716
      %v1157 = vmul.f32 %v1155, %v717
      %s1158 = scalar_lea.vmem %s4, 16
      %v1159 = vld [vmem:[%s1158] sm:$0x3]
      %v1160 = vpack.c.bf16 %v1156, %v1156
      %v1161 = vpack.c.bf16 %v1157, %v1157
      %v1163 = vsel %vm290, %v1159, 0
      %v1166 = vsel %vm294, %v1160, 0
      %v1169 = vsel %vm294, %v1161, 0
      %1171 = vmatpush.bf16.msra.mxu0 0
      %1172 = vmatpush.bf16.msra.mxu0 0
      %1173 = vmatpush.bf16.msra.mxu0 0
      %1174 = vmatpush.bf16.msra.mxu0 0
      %1175 = vmatpush.bf16.msra.mxu0 0
      %1176 = vmatpush.bf16.msra.mxu0 0
      %1177 = vmatpush.bf16.msra.mxu0 0
      %1178 = vmatpush.bf16.msra.mxu0 %v1166
      %1179 = vmatmul.bf16.gmra.mxu0 %v1163
      %v1180 = vpop.f32.mrf.mxu0
      %v1181 = vadd.f32 0.0, %v1180
      %v1182 = vpop.f32.mrf.mxu0
      %1183 = vdwg.mxu0
      %1184 = vmatpush.bf16.msra.mxu0 0
      %1185 = vmatpush.bf16.msra.mxu0 0
      %1186 = vmatpush.bf16.msra.mxu0 0
      %1187 = vmatpush.bf16.msra.mxu0 0
      %1188 = vmatpush.bf16.msra.mxu0 0
      %1189 = vmatpush.bf16.msra.mxu0 0
      %1190 = vmatpush.bf16.msra.mxu0 0
      %1191 = vmatpush.bf16.msra.mxu0 %v1169
      %1192 = vmatmul.bf16.gmra.mxu0 %v1163
      %v1193 = vpop.f32.mrf.mxu0
      %v1194 = vadd.f32 0.0, %v1193
      %v1195 = vpop.f32.mrf.mxu0
      %1196 = vdwg.mxu0
      %v1197 = vadd.f32 %v1148, %v1181
      %v1198 = vadd.f32 %v1149, %v1194
      %v1199 = vld [vmem:[%s5] sm:$0xf]
      %1201 = vset.pattern.permute.xlu0 0
      %1202 = vperm.xlu0 %1201, %v1199
      %v1203 = vpop.permute.xlu0 %1202
      %v1205 = vadd.f32 %v1197, %v1203
      %v1206 = vadd.f32 %v1198, %v1203
      %1207 = vst [vmem:[#allocation1] ss:$2 sm:$0xff] %v256
      %v1208 = vld.sshfl [vmem:[#allocation1] sm:$0xff pattern:$0x75316420]
      %v1209 = vld.sshfl [vmem:[#allocation1 + $0x8] sm:$0xff pattern:$0x75316420]
      %v1212 = vadd.f32 %v1205, %v1208
      %v1213 = vadd.f32 %v1206, %v1209
      %v1214 = vmax.f32 %v1212, 0.0
      %v1215 = vmax.f32 %v1213, 0.0
      %1216 = vst [vmem:[#allocation1] ss:$2 sm:$0xff] %v256
      %v1217 = vld.sshfl [vmem:[#allocation1] sm:$0xff pattern:$0x75316420]
      %v1218 = vld.sshfl [vmem:[#allocation1 + $0x8] sm:$0xff pattern:$0x75316420]
      %v1221 = vadd.f32 %v1214, %v1217
      %v1222 = vadd.f32 %v1215, %v1218
      %v1223 = vmax.f32 %v1221, 0.0
      %v1224 = vmax.f32 %v1222, 0.0
      %v1227 = vrot.slane %v1224, 4
      %vm1228 = vcmask 1043456
      %v1229 = vsel %vm1228, %v1223, %v1227
      %1231 = vst [vmem:[%s253] sm:$0xff] %v1229
      %s1232 = smul.u32 2, %s17
      %p1233 = scmp.lt.s32.totalorder %s1232, 3
      %s1234 = scalar_select %p1233, %s1232, 3
      %s1235 = smul.addr %s1234, 4
      %s1236 = scalar_lea.vmem %s6, %s1235
      // Predicated region
      $region45: #{basic_block_forward.1} parent=43 // pred_check
        %p1237 = pneg %p166
      $region46: #{basic_block_forward.1} parent=43 // pred_check_branch
        %1239 = sbr.rel (%p1237) target = $region48
      $region47: #{basic_block_forward.1} parent=43 // pred_region
        %s1240 = smul.u32 2, %s17
      $region48: #{basic_block_forward.1} parent=43 // pred_fallthru
        _
    $region44: #{basic_block_forward.1} parent=5 // pred_fallthru
      _
    %p1241 = scmp.le.s32.totalorder 2, %s12
    // Predicated region
    $region49: #{basic_block_forward.1} parent=5 // pred_check
      %p1242 = pneg %p1241
    $region50: #{basic_block_forward.1} parent=5 // pred_check_branch
      %1244 = sbr.rel (%p1242) target = $region52
    $region51: #{basic_block_forward.1} parent=5 // pred_region
      %s1245 = ssub.s32 %s12, 2
      // Predicated region
      $region53: #{basic_block_forward.1} parent=51 // pred_check
        %p1246 = pneg %p172
      $region54: #{basic_block_forward.1} parent=51 // pred_check_branch
        %1248 = sbr.rel (%p1246) target = $region56
      $region55: #{basic_block_forward.1} parent=51 // pred_region
        %s1249 = smul.u32 2, %s18
        %p1250 = scmp.lt.s32.totalorder %s1249, 3
        %s1251 = scalar_select %p1250, %s1249, 3
        %s1252 = smul.addr %s1251, 4
        %s1253 = scalar_lea.vmem %s6, %s1252
      $region56: #{basic_block_forward.1} parent=51 // pred_fallthru
        _
    $region52: #{basic_block_forward.1} parent=5 // pred_fallthru
      _
  $region6: #{basic_block_forward.1} parent=0 // loop_footer
    %s16 = sadd.s32 1, %s12
  $region7: #{basic_block_forward.1} parent=0 // loop_footer_branch
    %11 = sbr.rel target = $region3
  $region8: #{basic_block_forward.1} parent=0 // loop_exit
    _

</llo_original>
